<compile_context>
chip_gen: v5e
topology: v5e:2x2
jax: 0.10.0
libtpu: 0.0.40
codegen_flags: <defaults>
</compile_context>

<pallas_src>
import jax
import jax.numpy as jnp
from jax import lax
from jax.experimental import pallas as pl
from jax.experimental.pallas import tpu as pltpu


def _round_up(x, m):
    return (x + m - 1) // m * m


def gru_encoder_kernel(x_ref, lens_ref, wih_ref, whh_ref, bgi_ref, bhn_ref,
                       out_ref, gi_ref):
    """One (batch-tile, time-chunk) grid step of the GRU encoder.

    x_ref   : (t_chunk*b_tile, emb)       chunk of embedded inputs, time-major
                                          rows (row = t*b_tile + b), bf16/f32.
    lens_ref: (b_tile, 1) int32           valid lengths (pack_padded_sequence).
    wih_ref : (emb, 3*hid_pad)            gate-fused input weights, gate slabs
                                          [r|z|n] each 128-lane aligned.
    whh_ref : (hid_pad, 3*hid_pad)        gate-fused hidden weights.
    bgi_ref : (1, 3*hid_pad) f32          b_ih + [b_hr, b_hz, 0] folded bias.
    bhn_ref : (1, hid_pad)   f32          b_hn (stays inside r * (...)).
    out_ref : (b_tile, hid_pad) f32       hidden state; also the h carry across
                                          time chunks (revisited output block).
    gi_ref  : (t_chunk*b_tile, 3*hid_pad) f32 scratch for the hoisted GEMM.
    """
    tc = pl.program_id(1)
    b_tile = lens_ref.shape[0]
    hid_pad = whh_ref.shape[0]
    t_chunk = x_ref.shape[0] // b_tile

    @pl.when(tc == 0)
    def _init():
        out_ref[...] = jnp.zeros_like(out_ref)

    # Hoisted, gate-fused input-side GEMM for this chunk (bf16 in, f32 accum),
    # with the combined (input + hidden r/z) biases folded in.
    gi_ref[...] = (
        jnp.dot(x_ref[...], wih_ref[...], preferred_element_type=jnp.float32)
        + bgi_ref[...])

    # Loop-invariant operands loaded / broadcast exactly once.
    whh = whh_ref[...]                                        # (hid_pad, 3*hid_pad)
    bhn = jnp.broadcast_to(bhn_ref[...], (b_tile, hid_pad))   # hoisted broadcast
    lens = lens_ref[...]                                       # (b_tile, 1) i32
    t0 = tc * t_chunk

    def step(i, h):
        row = pl.multiple_of(i * b_tile, b_tile)
        gi = gi_ref[pl.ds(row, b_tile), :]                     # (b_tile, 3*hid_pad)
        # Single recurrent matmul per step; gate slabs are 128-lane aligned so
        # each slice below is a whole-vreg slice (no masked lane selects).
        gh = jnp.dot(h.astype(whh.dtype), whh,
                     preferred_element_type=jnp.float32)
        r = jax.nn.sigmoid(gi[:, :hid_pad] + gh[:, :hid_pad])
        z = jax.nn.sigmoid(gi[:, hid_pad:2 * hid_pad]
                           + gh[:, hid_pad:2 * hid_pad])
        n = jnp.tanh(gi[:, 2 * hid_pad:] + r * (gh[:, 2 * hid_pad:] + bhn))
        h_new = (1.0 - z) * n + z * h                          # PyTorch blend
        # pack_padded_sequence: freeze rows whose sequence has ended.
        return jnp.where((t0 + i) < lens, h_new, h)

    h = lax.fori_loop(0, t_chunk, step, out_ref[...],
                      unroll=min(t_chunk, 8))
    out_ref[...] = h


def encoder_forward(src, src_lengths, params, *, compute_dtype=jnp.bfloat16,
                    b_tile=None, t_chunk=64):
    """Encoder.forward(src, src_lengths) -> hidden of shape (1, batch, hid)."""
    emb_table = params["emb"]      # (vocab, emb_dim)
    w_ih = params["w_ih"]          # (3*hid, emb_dim)  PyTorch gate order [r; z; n]
    w_hh = params["w_hh"]          # (3*hid, hid)
    b_ih = params["b_ih"]          # (3*hid,)
    b_hh = params["b_hh"]          # (3*hid,)

    seq_len, batch = src.shape
    emb_dim = emb_table.shape[1]
    hid = w_hh.shape[1]
    assert w_ih.shape[0] == 3 * hid and w_hh.shape[0] == 3 * hid, \
        "weights must use PyTorch GRU gate order [r; z; n]"
    hid_pad = _round_up(hid, 128)          # 128-lane aligned gate slabs

    # ---- glue (plain JAX): embedding gather + eval-mode dropout (identity) ----
    embedded = emb_table[src].astype(compute_dtype)            # (seq, batch, emb)

    # ---- pad batch to a multiple of 8 sublanes, time to a chunk multiple ----
    b_pad = _round_up(batch, 8)
    if b_tile is None:
        b_tile = b_pad
    assert b_pad % b_tile == 0 and b_tile % 8 == 0
    t_chunk = min(t_chunk, seq_len)
    seq_pad = _round_up(seq_len, t_chunk)

    lens = jnp.zeros((b_pad,), jnp.int32).at[:batch].set(
        src_lengths.astype(jnp.int32))
    if b_pad != batch:
        embedded = jnp.pad(embedded, ((0, 0), (0, b_pad - batch), (0, 0)))
    if seq_pad != seq_len:
        # Padded timesteps are frozen by the (t < len) mask -> harmless.
        embedded = jnp.pad(embedded, ((0, seq_pad - seq_len), (0, 0), (0, 0)))

    n_bt = b_pad // b_tile
    n_tc = seq_pad // t_chunk

    # (seq, batch, emb) -> (n_bt, seq*b_tile, emb): time-major rows per tile.
    x_tiled = (embedded.reshape(seq_pad, n_bt, b_tile, emb_dim)
               .transpose(1, 0, 2, 3)
               .reshape(n_bt, seq_pad * b_tile, emb_dim))
    lens_tiled = lens.reshape(n_bt, b_tile, 1)

    # ---- gate-fused, 128-lane padded weights (padded lanes/rows are zero) ----
    def fuse_pad(w, in_dim, in_pad):
        # (3*hid, in_dim) -> (in_pad, 3*hid_pad); gate g lives at
        # columns [g*hid_pad, g*hid_pad + hid), rows [0, in_dim).
        out = jnp.zeros((in_pad, 3 * hid_pad), jnp.float32)
        for g in range(3):
            out = out.at[:in_dim, g * hid_pad:g * hid_pad + hid].set(
                w[g * hid:(g + 1) * hid, :].T.astype(jnp.float32))
        return out

    def pad_bias(b):
        out = jnp.zeros((1, 3 * hid_pad), jnp.float32)
        for g in range(3):
            out = out.at[0, g * hid_pad:g * hid_pad + hid].set(
                b[g * hid:(g + 1) * hid].astype(jnp.float32))
        return out

    wih_p = fuse_pad(w_ih, emb_dim, emb_dim).astype(compute_dtype)
    whh_p = fuse_pad(w_hh, hid, hid_pad).astype(compute_dtype)

    # Fold biases: r/z gates get b_ih + b_hh; n gate keeps only b_in here
    # (b_hn is applied inside r * (W_hn h + b_hn) in the kernel).
    b_hh_rz = jnp.concatenate([b_hh[:2 * hid], jnp.zeros((hid,), b_hh.dtype)])
    bgi_p = pad_bias(b_ih) + pad_bias(b_hh_rz)                 # (1, 3*hid_pad) f32
    bhn_p = jnp.zeros((1, hid_pad), jnp.float32).at[0, :hid].set(
        b_hh[2 * hid:].astype(jnp.float32))

    out = pl.pallas_call(
        gru_encoder_kernel,
        out_shape=jax.ShapeDtypeStruct((n_bt, b_tile, hid_pad), jnp.float32),
        grid_spec=pltpu.PrefetchScalarGridSpec(
            num_scalar_prefetch=0,
            grid=(n_bt, n_tc),     # (batch tiles: parallel, time chunks: carry)
            in_specs=[
                pl.BlockSpec((None, t_chunk * b_tile, emb_dim),
                             lambda bi, tc: (bi, tc, 0)),
                pl.BlockSpec((None, b_tile, 1), lambda bi, tc: (bi, 0, 0)),
                pl.BlockSpec((emb_dim, 3 * hid_pad), lambda bi, tc: (0, 0)),
                pl.BlockSpec((hid_pad, 3 * hid_pad), lambda bi, tc: (0, 0)),
                pl.BlockSpec((1, 3 * hid_pad), lambda bi, tc: (0, 0)),
                pl.BlockSpec((1, hid_pad), lambda bi, tc: (0, 0)),
            ],
            out_specs=pl.BlockSpec((None, b_tile, hid_pad),
                                   lambda bi, tc: (bi, 0, 0)),
            scratch_shapes=[
                pltpu.VMEM((t_chunk * b_tile, 3 * hid_pad), jnp.float32)],
        ),
        compiler_params=pltpu.CompilerParams(
            dimension_semantics=("parallel", "arbitrary"),
            vmem_limit_bytes=64 * 1024 * 1024),
    )(x_tiled, lens_tiled, wih_p, whh_p, bgi_p, bhn_p)

    hidden = out.reshape(b_pad, hid_pad)[:batch, :hid]
    return hidden[None]                                        # (1, batch, hid)


def encoder_reference(src, src_lengths, params):
    """Pure-JAX reference reproducing PyTorch GRU + pack_padded_sequence."""
    emb = params["emb"][src].astype(jnp.float32)
    w_ih, w_hh = params["w_ih"], params["w_hh"]
    b_ih, b_hh = params["b_ih"], params["b_hh"]
    hid = w_hh.shape[1]

    def step(h, inp):
        x, t = inp
        gi = x @ w_ih.T + b_ih
        gh = h @ w_hh.T + b_hh
        r = jax.nn.sigmoid(gi[:, :hid] + gh[:, :hid])
        z = jax.nn.sigmoid(gi[:, hid:2 * hid] + gh[:, hid:2 * hid])
        n = jnp.tanh(gi[:, 2 * hid:] + r * gh[:, 2 * hid:])
        h_new = (1.0 - z) * n + z * h
        mask = (t < src_lengths)[:, None]
        return jnp.where(mask, h_new, h), None

    h0 = jnp.zeros((src.shape[1], hid), jnp.float32)
    hT, _ = lax.scan(step, h0, (emb, jnp.arange(src.shape[0])))
    return hT[None]


if __name__ == "__main__":
    # Small shapes consistent with the module's forward.
    vocab, emb_dim, hid_dim = 50, 16, 32
    seq_len, batch = 8, 8

    key = jax.random.PRNGKey(0)
    k_emb, k_wih, k_whh, k_bih, k_bhh, k_src = jax.random.split(key, 6)
    bound = 1.0 / (hid_dim ** 0.5)
    params = {
        "emb": jax.random.normal(k_emb, (vocab, emb_dim), jnp.float32),
        "w_ih": jax.random.uniform(k_wih, (3 * hid_dim, emb_dim), jnp.float32,
                                   -bound, bound),
        "w_hh": jax.random.uniform(k_whh, (3 * hid_dim, hid_dim), jnp.float32,
                                   -bound, bound),
        "b_ih": jax.random.uniform(k_bih, (3 * hid_dim,), jnp.float32,
                                   -bound, bound),
        "b_hh": jax.random.uniform(k_bhh, (3 * hid_dim,), jnp.float32,
                                   -bound, bound),
    }

    src = jax.random.randint(k_src, (seq_len, batch), 0, vocab, jnp.int32)
    src_lengths = jnp.array([8, 7, 6, 5, 4, 3, 2, 1], jnp.int32)  # sorted desc

    ref = encoder_reference(src, src_lengths, params)

    # f32 path: tight check of recurrence / pack_padded freeze semantics.
    hidden_f32 = encoder_forward(src, src_lengths, params,
                                 compute_dtype=jnp.float32)
    jax.block_until_ready(hidden_f32)
    assert hidden_f32.shape == (1, batch, hid_dim)
    err32 = float(jnp.max(jnp.abs(hidden_f32 - ref)))
    assert err32 < 1e-5, f"f32 max abs err = {err32}"

    # bf16 MXU path (default): looser tolerance for bf16 matmul rounding.
    hidden_bf16 = encoder_forward(src, src_lengths, params)
    jax.block_until_ready(hidden_bf16)
    assert hidden_bf16.shape == (1, batch, hid_dim)
    err16 = float(jnp.max(jnp.abs(hidden_bf16 - ref)))
    assert err16 < 5e-2, f"bf16 max abs err = {err16}"

    print("KERNEL_OK")
</pallas_src>

<mosaic_0001>
module attributes {stable_mosaic.version = 11 : i64} {
  func.func @gru_encoder_kernel(%arg0: i32, %arg1: i32, %arg2: memref<1x64x16xf32, #tpu.memory_space<vmem>>, %arg3: memref<1x8x1xi32, #tpu.memory_space<vmem>>, %arg4: memref<16x384xf32, #tpu.memory_space<vmem>>, %arg5: memref<128x384xf32, #tpu.memory_space<vmem>>, %arg6: memref<1x384xf32, #tpu.memory_space<vmem>>, %arg7: memref<1x128xf32, #tpu.memory_space<vmem>>, %arg8: memref<1x8x128xf32, #tpu.memory_space<vmem>>, %arg9: memref<64x384xf32, #tpu.memory_space<vmem>>) attributes {dimension_semantics = [#tpu.dimension_semantics<parallel>, #tpu.dimension_semantics<arbitrary>], iteration_bounds = array<i64: 1, 1>, scalar_prefetch = 0 : i64, scratch_operands = 1 : i64, tpu.core_type = #tpu.core_type<tc>, window_params = [{transform_indices = @transform_0, window_bounds = array<i64: 1, 64, 16>}, {transform_indices = @transform_1, window_bounds = array<i64: 1, 8, 1>}, {pipeline_mode = #tpu.pipeline_mode<synchronous>, transform_indices = @transform_2, window_bounds = array<i64: 16, 384>}, {pipeline_mode = #tpu.pipeline_mode<synchronous>, transform_indices = @transform_3, window_bounds = array<i64: 128, 384>}, {pipeline_mode = #tpu.pipeline_mode<synchronous>, transform_indices = @transform_4, window_bounds = array<i64: 1, 384>}, {pipeline_mode = #tpu.pipeline_mode<synchronous>, transform_indices = @transform_5, window_bounds = array<i64: 1, 128>}, {transform_indices = @transform_6, window_bounds = array<i64: 1, 8, 128>}]} {
    %c0_i32 = arith.constant 0 : i32
    %0 = arith.cmpi eq, %arg1, %c0_i32 : i32
    %1 = arith.extui %0 : i1 to i32
    %c0_i32_0 = arith.constant 0 : i32
    %2 = arith.cmpi ne, %1, %c0_i32_0 : i32
    scf.if %2 {
      %cst_72 = arith.constant 0.000000e+00 : f32
      %327 = vector.broadcast %cst_72 : f32 to vector<8x128xf32>
      %c0_73 = arith.constant 0 : index
      %c0_74 = arith.constant 0 : index
      %c0_75 = arith.constant 0 : index
      %328 = vector.load %arg8[%c0_73, %c0_74, %c0_75] : memref<1x8x128xf32, #tpu.memory_space<vmem>>, vector<1x8x128xf32>
      %329 = vector.shape_cast %328 : vector<1x8x128xf32> to vector<8x128xf32>
      %330 = vector.shape_cast %327 : vector<8x128xf32> to vector<1x8x128xf32>
      tpu.vector_store %arg8[%c0_73, %c0_74, %c0_75], %330 {strides = array<i32>} : memref<1x8x128xf32, #tpu.memory_space<vmem>>, vector<1x8x128xf32>,
    } else {
    }
    %c0 = arith.constant 0 : index
    %c0_1 = arith.constant 0 : index
    %c0_2 = arith.constant 0 : index
    %3 = vector.load %arg2[%c0, %c0_1, %c0_2] : memref<1x64x16xf32, #tpu.memory_space<vmem>>, vector<1x64x16xf32>
    %4 = vector.shape_cast %3 : vector<1x64x16xf32> to vector<64x16xf32>
    %c0_3 = arith.constant 0 : index
    %c0_4 = arith.constant 0 : index
    %5 = vector.load %arg4[%c0_3, %c0_4] : memref<16x384xf32, #tpu.memory_space<vmem>>, vector<16x384xf32>
    %cst = arith.constant dense<0.000000e+00> : vector<64x384xf32>
    %6 = tpu.matmul %4, %5, %cst {dimension_numbers = #tpu.dot_dimension_numbers<[1], [0], [0], [1], [0, 0, 1, 1], [], []>} : vector<64x16xf32>, vector<16x384xf32>, vector<64x384xf32> -> vector<64x384xf32>
    %c0_5 = arith.constant 0 : index
    %c0_6 = arith.constant 0 : index
    %7 = vector.load %arg6[%c0_5, %c0_6] : memref<1x384xf32, #tpu.memory_space<vmem>>, vector<1x384xf32>
    %8 = vector.broadcast %7 : vector<1x384xf32> to vector<64x384xf32>
    %9 = arith.addf %6, %8 : vector<64x384xf32>
    %c0_7 = arith.constant 0 : index
    %c0_8 = arith.constant 0 : index
    %10 = vector.load %arg9[%c0_7, %c0_8] : memref<64x384xf32, #tpu.memory_space<vmem>>, vector<64x384xf32>
    tpu.vector_store %arg9[%c0_7, %c0_8], %9 {strides = array<i32>} : memref<64x384xf32, #tpu.memory_space<vmem>>, vector<64x384xf32>,
    %c0_9 = arith.constant 0 : index
    %c0_10 = arith.constant 0 : index
    %11 = vector.load %arg5[%c0_9, %c0_10] : memref<128x384xf32, #tpu.memory_space<vmem>>, vector<128x384xf32>
    %c0_11 = arith.constant 0 : index
    %c0_12 = arith.constant 0 : index
    %12 = vector.load %arg7[%c0_11, %c0_12] : memref<1x128xf32, #tpu.memory_space<vmem>>, vector<1x128xf32>
    %13 = vector.shape_cast %12 : vector<1x128xf32> to vector<1x128xf32>
    %14 = vector.broadcast %13 : vector<1x128xf32> to vector<8x128xf32>
    %c0_13 = arith.constant 0 : index
    %c0_14 = arith.constant 0 : index
    %c0_15 = arith.constant 0 : index
    %15 = vector.load %arg3[%c0_13, %c0_14, %c0_15] : memref<1x8x1xi32, #tpu.memory_space<vmem>>, vector<1x8x1xi32>
    %16 = vector.shape_cast %15 : vector<1x8x1xi32> to vector<8x1xi32>
    %c8_i32 = arith.constant 8 : i32
    %17 = arith.muli %arg1, %c8_i32 : i32
    %c0_16 = arith.constant 0 : index
    %c0_17 = arith.constant 0 : index
    %c0_18 = arith.constant 0 : index
    %18 = vector.load %arg8[%c0_16, %c0_17, %c0_18] : memref<1x8x128xf32, #tpu.memory_space<vmem>>, vector<1x8x128xf32>
    %19 = vector.shape_cast %18 : vector<1x8x128xf32> to vector<8x128xf32>
    %c0_i32_19 = arith.constant 0 : i32
    %c8_i32_20 = arith.constant 8 : i32
    %20 = arith.muli %c0_i32_19, %c8_i32_20 : i32
    %21 = tpu.assume_multiple %20, 8 : i32
    %22 = arith.index_cast %21 : i32 to index
    %c0_21 = arith.constant 0 : index
    %23 = vector.load %arg9[%22, %c0_21] : memref<64x384xf32, #tpu.memory_space<vmem>>, vector<8x384xf32>
    %cst_22 = arith.constant dense<0.000000e+00> : vector<8x384xf32>
    %24 = tpu.matmul %19, %11, %cst_22 {dimension_numbers = #tpu.dot_dimension_numbers<[1], [0], [0], [1], [0, 0, 1, 1], [], []>} : vector<8x128xf32>, vector<128x384xf32>, vector<8x384xf32> -> vector<8x384xf32>
    %25 = vector.extract_strided_slice %23 {offsets = [0, 0], sizes = [8, 128], strides = [1, 1]} : vector<8x384xf32> to vector<8x128xf32>
    %26 = vector.extract_strided_slice %24 {offsets = [0, 0], sizes = [8, 128], strides = [1, 1]} : vector<8x384xf32> to vector<8x128xf32>
    %27 = arith.addf %25, %26 : vector<8x128xf32>
    %28 = arith.negf %27 : vector<8x128xf32>
    %29 = math.exp %28 : vector<8x128xf32>
    %cst_23 = arith.constant 1.000000e+00 : f32
    %30 = vector.broadcast %cst_23 : f32 to vector<8x128xf32>
    %31 = arith.addf %30, %29 : vector<8x128xf32>
    %32 = arith.divf %30, %31 : vector<8x128xf32>
    %33 = vector.extract_strided_slice %23 {offsets = [0, 128], sizes = [8, 128], strides = [1, 1]} : vector<8x384xf32> to vector<8x128xf32>
    %34 = vector.extract_strided_slice %24 {offsets = [0, 128], sizes = [8, 128], strides = [1, 1]} : vector<8x384xf32> to vector<8x128xf32>
    %35 = arith.addf %33, %34 : vector<8x128xf32>
    %36 = arith.negf %35 : vector<8x128xf32>
    %37 = math.exp %36 : vector<8x128xf32>
    %cst_24 = arith.constant 1.000000e+00 : f32
    %38 = vector.broadcast %cst_24 : f32 to vector<8x128xf32>
    %39 = arith.addf %38, %37 : vector<8x128xf32>
    %40 = arith.divf %38, %39 : vector<8x128xf32>
    %41 = vector.extract_strided_slice %23 {offsets = [0, 256], sizes = [8, 128], strides = [1, 1]} : vector<8x384xf32> to vector<8x128xf32>
    %42 = vector.extract_strided_slice %24 {offsets = [0, 256], sizes = [8, 128], strides = [1, 1]} : vector<8x384xf32> to vector<8x128xf32>
    %43 = arith.addf %42, %14 : vector<8x128xf32>
    %44 = arith.mulf %32, %43 : vector<8x128xf32>
    %45 = arith.addf %41, %44 : vector<8x128xf32>
    %46 = math.tanh %45 : vector<8x128xf32>
    %cst_25 = arith.constant 1.000000e+00 : f32
    %47 = vector.broadcast %cst_25 : f32 to vector<8x128xf32>
    %48 = arith.subf %47, %40 : vector<8x128xf32>
    %49 = arith.mulf %48, %46 : vector<8x128xf32>
    %50 = arith.mulf %40, %19 : vector<8x128xf32>
    %51 = arith.addf %49, %50 : vector<8x128xf32>
    %52 = arith.addi %17, %c0_i32_19 : i32
    %53 = vector.broadcast %52 : i32 to vector<8x1xi32>
    %54 = arith.cmpi slt, %53, %16 : vector<8x1xi32>
    %55 = vector.shape_cast %54 : vector<8x1xi1> to vector<8x1xi1>
    %56 = vector.broadcast %55 : vector<8x1xi1> to vector<8x128xi1>
    %57 = arith.select %56, %51, %19 : vector<8x128xi1>, vector<8x128xf32>
    %c1_i32 = arith.constant 1 : i32
    %c8_i32_26 = arith.constant 8 : i32
    %58 = arith.muli %c1_i32, %c8_i32_26 : i32
    %59 = tpu.assume_multiple %58, 8 : i32
    %60 = arith.index_cast %59 : i32 to index
    %c0_27 = arith.constant 0 : index
    %61 = vector.load %arg9[%60, %c0_27] : memref<64x384xf32, #tpu.memory_space<vmem>>, vector<8x384xf32>
    %cst_28 = arith.constant dense<0.000000e+00> : vector<8x384xf32>
    %62 = tpu.matmul %57, %11, %cst_28 {dimension_numbers = #tpu.dot_dimension_numbers<[1], [0], [0], [1], [0, 0, 1, 1], [], []>} : vector<8x128xf32>, vector<128x384xf32>, vector<8x384xf32> -> vector<8x384xf32>
    %63 = vector.extract_strided_slice %61 {offsets = [0, 0], sizes = [8, 128], strides = [1, 1]} : vector<8x384xf32> to vector<8x128xf32>
    %64 = vector.extract_strided_slice %62 {offsets = [0, 0], sizes = [8, 128], strides = [1, 1]} : vector<8x384xf32> to vector<8x128xf32>
    %65 = arith.addf %63, %64 : vector<8x128xf32>
    %66 = arith.negf %65 : vector<8x128xf32>
    %67 = math.exp %66 : vector<8x128xf32>
    %cst_29 = arith.constant 1.000000e+00 : f32
    %68 = vector.broadcast %cst_29 : f32 to vector<8x128xf32>
    %69 = arith.addf %68, %67 : vector<8x128xf32>
    %70 = arith.divf %68, %69 : vector<8x128xf32>
    %71 = vector.extract_strided_slice %61 {offsets = [0, 128], sizes = [8, 128], strides = [1, 1]} : vector<8x384xf32> to vector<8x128xf32>
    %72 = vector.extract_strided_slice %62 {offsets = [0, 128], sizes = [8, 128], strides = [1, 1]} : vector<8x384xf32> to vector<8x128xf32>
    %73 = arith.addf %71, %72 : vector<8x128xf32>
    %74 = arith.negf %73 : vector<8x128xf32>
    %75 = math.exp %74 : vector<8x128xf32>
    %cst_30 = arith.constant 1.000000e+00 : f32
    %76 = vector.broadcast %cst_30 : f32 to vector<8x128xf32>
    %77 = arith.addf %76, %75 : vector<8x128xf32>
    %78 = arith.divf %76, %77 : vector<8x128xf32>
    %79 = vector.extract_strided_slice %61 {offsets = [0, 256], sizes = [8, 128], strides = [1, 1]} : vector<8x384xf32> to vector<8x128xf32>
    %80 = vector.extract_strided_slice %62 {offsets = [0, 256], sizes = [8, 128], strides = [1, 1]} : vector<8x384xf32> to vector<8x128xf32>
    %81 = arith.addf %80, %14 : vector<8x128xf32>
    %82 = arith.mulf %70, %81 : vector<8x128xf32>
    %83 = arith.addf %79, %82 : vector<8x128xf32>
    %84 = math.tanh %83 : vector<8x128xf32>
    %cst_31 = arith.constant 1.000000e+00 : f32
    %85 = vector.broadcast %cst_31 : f32 to vector<8x128xf32>
    %86 = arith.subf %85, %78 : vector<8x128xf32>
    %87 = arith.mulf %86, %84 : vector<8x128xf32>
    %88 = arith.mulf %78, %57 : vector<8x128xf32>
    %89 = arith.addf %87, %88 : vector<8x128xf32>
    %90 = arith.addi %17, %c1_i32 : i32
    %91 = vector.broadcast %90 : i32 to vector<8x1xi32>
    %92 = arith.cmpi slt, %91, %16 : vector<8x1xi32>
    %93 = vector.shape_cast %92 : vector<8x1xi1> to vector<8x1xi1>
    %94 = vector.broadcast %93 : vector<8x1xi1> to vector<8x128xi1>
    %95 = arith.select %94, %89, %57 : vector<8x128xi1>, vector<8x128xf32>
    %c2_i32 = arith.constant 2 : i32
    %c8_i32_32 = arith.constant 8 : i32
    %96 = arith.muli %c2_i32, %c8_i32_32 : i32
    %97 = tpu.assume_multiple %96, 8 : i32
    %98 = arith.index_cast %97 : i32 to index
    %c0_33 = arith.constant 0 : index
    %99 = vector.load %arg9[%98, %c0_33] : memref<64x384xf32, #tpu.memory_space<vmem>>, vector<8x384xf32>
    %cst_34 = arith.constant dense<0.000000e+00> : vector<8x384xf32>
    %100 = tpu.matmul %95, %11, %cst_34 {dimension_numbers = #tpu.dot_dimension_numbers<[1], [0], [0], [1], [0, 0, 1, 1], [], []>} : vector<8x128xf32>, vector<128x384xf32>, vector<8x384xf32> -> vector<8x384xf32>
    %101 = vector.extract_strided_slice %99 {offsets = [0, 0], sizes = [8, 128], strides = [1, 1]} : vector<8x384xf32> to vector<8x128xf32>
    %102 = vector.extract_strided_slice %100 {offsets = [0, 0], sizes = [8, 128], strides = [1, 1]} : vector<8x384xf32> to vector<8x128xf32>
    %103 = arith.addf %101, %102 : vector<8x128xf32>
    %104 = arith.negf %103 : vector<8x128xf32>
    %105 = math.exp %104 : vector<8x128xf32>
    %cst_35 = arith.constant 1.000000e+00 : f32
    %106 = vector.broadcast %cst_35 : f32 to vector<8x128xf32>
    %107 = arith.addf %106, %105 : vector<8x128xf32>
    %108 = arith.divf %106, %107 : vector<8x128xf32>
    %109 = vector.extract_strided_slice %99 {offsets = [0, 128], sizes = [8, 128], strides = [1, 1]} : vector<8x384xf32> to vector<8x128xf32>
    %110 = vector.extract_strided_slice %100 {offsets = [0, 128], sizes = [8, 128], strides = [1, 1]} : vector<8x384xf32> to vector<8x128xf32>
    %111 = arith.addf %109, %110 : vector<8x128xf32>
    %112 = arith.negf %111 : vector<8x128xf32>
    %113 = math.exp %112 : vector<8x128xf32>
    %cst_36 = arith.constant 1.000000e+00 : f32
    %114 = vector.broadcast %cst_36 : f32 to vector<8x128xf32>
    %115 = arith.addf %114, %113 : vector<8x128xf32>
    %116 = arith.divf %114, %115 : vector<8x128xf32>
    %117 = vector.extract_strided_slice %99 {offsets = [0, 256], sizes = [8, 128], strides = [1, 1]} : vector<8x384xf32> to vector<8x128xf32>
    %118 = vector.extract_strided_slice %100 {offsets = [0, 256], sizes = [8, 128], strides = [1, 1]} : vector<8x384xf32> to vector<8x128xf32>
    %119 = arith.addf %118, %14 : vector<8x128xf32>
    %120 = arith.mulf %108, %119 : vector<8x128xf32>
    %121 = arith.addf %117, %120 : vector<8x128xf32>
    %122 = math.tanh %121 : vector<8x128xf32>
    %cst_37 = arith.constant 1.000000e+00 : f32
    %123 = vector.broadcast %cst_37 : f32 to vector<8x128xf32>
    %124 = arith.subf %123, %116 : vector<8x128xf32>
    %125 = arith.mulf %124, %122 : vector<8x128xf32>
    %126 = arith.mulf %116, %95 : vector<8x128xf32>
    %127 = arith.addf %125, %126 : vector<8x128xf32>
    %128 = arith.addi %17, %c2_i32 : i32
    %129 = vector.broadcast %128 : i32 to vector<8x1xi32>
    %130 = arith.cmpi slt, %129, %16 : vector<8x1xi32>
    %131 = vector.shape_cast %130 : vector<8x1xi1> to vector<8x1xi1>
    %132 = vector.broadcast %131 : vector<8x1xi1> to vector<8x128xi1>
    %133 = arith.select %132, %127, %95 : vector<8x128xi1>, vector<8x128xf32>
    %c3_i32 = arith.constant 3 : i32
    %c8_i32_38 = arith.constant 8 : i32
    %134 = arith.muli %c3_i32, %c8_i32_38 : i32
    %135 = tpu.assume_multiple %134, 8 : i32
    %136 = arith.index_cast %135 : i32 to index
    %c0_39 = arith.constant 0 : index
    %137 = vector.load %arg9[%136, %c0_39] : memref<64x384xf32, #tpu.memory_space<vmem>>, vector<8x384xf32>
    %cst_40 = arith.constant dense<0.000000e+00> : vector<8x384xf32>
    %138 = tpu.matmul %133, %11, %cst_40 {dimension_numbers = #tpu.dot_dimension_numbers<[1], [0], [0], [1], [0, 0, 1, 1], [], []>} : vector<8x128xf32>, vector<128x384xf32>, vector<8x384xf32> -> vector<8x384xf32>
    %139 = vector.extract_strided_slice %137 {offsets = [0, 0], sizes = [8, 128], strides = [1, 1]} : vector<8x384xf32> to vector<8x128xf32>
    %140 = vector.extract_strided_slice %138 {offsets = [0, 0], sizes = [8, 128], strides = [1, 1]} : vector<8x384xf32> to vector<8x128xf32>
    %141 = arith.addf %139, %140 : vector<8x128xf32>
    %142 = arith.negf %141 : vector<8x128xf32>
    %143 = math.exp %142 : vector<8x128xf32>
    %cst_41 = arith.constant 1.000000e+00 : f32
    %144 = vector.broadcast %cst_41 : f32 to vector<8x128xf32>
    %145 = arith.addf %144, %143 : vector<8x128xf32>
    %146 = arith.divf %144, %145 : vector<8x128xf32>
    %147 = vector.extract_strided_slice %137 {offsets = [0, 128], sizes = [8, 128], strides = [1, 1]} : vector<8x384xf32> to vector<8x128xf32>
    %148 = vector.extract_strided_slice %138 {offsets = [0, 128], sizes = [8, 128], strides = [1, 1]} : vector<8x384xf32> to vector<8x128xf32>
    %149 = arith.addf %147, %148 : vector<8x128xf32>
    %150 = arith.negf %149 : vector<8x128xf32>
    %151 = math.exp %150 : vector<8x128xf32>
    %cst_42 = arith.constant 1.000000e+00 : f32
    %152 = vector.broadcast %cst_42 : f32 to vector<8x128xf32>
    %153 = arith.addf %152, %151 : vector<8x128xf32>
    %154 = arith.divf %152, %153 : vector<8x128xf32>
    %155 = vector.extract_strided_slice %137 {offsets = [0, 256], sizes = [8, 128], strides = [1, 1]} : vector<8x384xf32> to vector<8x128xf32>
    %156 = vector.extract_strided_slice %138 {offsets = [0, 256], sizes = [8, 128], strides = [1, 1]} : vector<8x384xf32> to vector<8x128xf32>
    %157 = arith.addf %156, %14 : vector<8x128xf32>
    %158 = arith.mulf %146, %157 : vector<8x128xf32>
    %159 = arith.addf %155, %158 : vector<8x128xf32>
    %160 = math.tanh %159 : vector<8x128xf32>
    %cst_43 = arith.constant 1.000000e+00 : f32
    %161 = vector.broadcast %cst_43 : f32 to vector<8x128xf32>
    %162 = arith.subf %161, %154 : vector<8x128xf32>
    %163 = arith.mulf %162, %160 : vector<8x128xf32>
    %164 = arith.mulf %154, %133 : vector<8x128xf32>
    %165 = arith.addf %163, %164 : vector<8x128xf32>
    %166 = arith.addi %17, %c3_i32 : i32
    %167 = vector.broadcast %166 : i32 to vector<8x1xi32>
    %168 = arith.cmpi slt, %167, %16 : vector<8x1xi32>
    %169 = vector.shape_cast %168 : vector<8x1xi1> to vector<8x1xi1>
    %170 = vector.broadcast %169 : vector<8x1xi1> to vector<8x128xi1>
    %171 = arith.select %170, %165, %133 : vector<8x128xi1>, vector<8x128xf32>
    %c4_i32 = arith.constant 4 : i32
    %c8_i32_44 = arith.constant 8 : i32
    %172 = arith.muli %c4_i32, %c8_i32_44 : i32
    %173 = tpu.assume_multiple %172, 8 : i32
    %174 = arith.index_cast %173 : i32 to index
    %c0_45 = arith.constant 0 : index
    %175 = vector.load %arg9[%174, %c0_45] : memref<64x384xf32, #tpu.memory_space<vmem>>, vector<8x384xf32>
    %cst_46 = arith.constant dense<0.000000e+00> : vector<8x384xf32>
    %176 = tpu.matmul %171, %11, %cst_46 {dimension_numbers = #tpu.dot_dimension_numbers<[1], [0], [0], [1], [0, 0, 1, 1], [], []>} : vector<8x128xf32>, vector<128x384xf32>, vector<8x384xf32> -> vector<8x384xf32>
    %177 = vector.extract_strided_slice %175 {offsets = [0, 0], sizes = [8, 128], strides = [1, 1]} : vector<8x384xf32> to vector<8x128xf32>
    %178 = vector.extract_strided_slice %176 {offsets = [0, 0], sizes = [8, 128], strides = [1, 1]} : vector<8x384xf32> to vector<8x128xf32>
    %179 = arith.addf %177, %178 : vector<8x128xf32>
    %180 = arith.negf %179 : vector<8x128xf32>
    %181 = math.exp %180 : vector<8x128xf32>
    %cst_47 = arith.constant 1.000000e+00 : f32
    %182 = vector.broadcast %cst_47 : f32 to vector<8x128xf32>
    %183 = arith.addf %182, %181 : vector<8x128xf32>
    %184 = arith.divf %182, %183 : vector<8x128xf32>
    %185 = vector.extract_strided_slice %175 {offsets = [0, 128], sizes = [8, 128], strides = [1, 1]} : vector<8x384xf32> to vector<8x128xf32>
    %186 = vector.extract_strided_slice %176 {offsets = [0, 128], sizes = [8, 128], strides = [1, 1]} : vector<8x384xf32> to vector<8x128xf32>
    %187 = arith.addf %185, %186 : vector<8x128xf32>
    %188 = arith.negf %187 : vector<8x128xf32>
    %189 = math.exp %188 : vector<8x128xf32>
    %cst_48 = arith.constant 1.000000e+00 : f32
    %190 = vector.broadcast %cst_48 : f32 to vector<8x128xf32>
    %191 = arith.addf %190, %189 : vector<8x128xf32>
    %192 = arith.divf %190, %191 : vector<8x128xf32>
    %193 = vector.extract_strided_slice %175 {offsets = [0, 256], sizes = [8, 128], strides = [1, 1]} : vector<8x384xf32> to vector<8x128xf32>
    %194 = vector.extract_strided_slice %176 {offsets = [0, 256], sizes = [8, 128], strides = [1, 1]} : vector<8x384xf32> to vector<8x128xf32>
    %195 = arith.addf %194, %14 : vector<8x128xf32>
    %196 = arith.mulf %184, %195 : vector<8x128xf32>
    %197 = arith.addf %193, %196 : vector<8x128xf32>
    %198 = math.tanh %197 : vector<8x128xf32>
    %cst_49 = arith.constant 1.000000e+00 : f32
    %199 = vector.broadcast %cst_49 : f32 to vector<8x128xf32>
    %200 = arith.subf %199, %192 : vector<8x128xf32>
    %201 = arith.mulf %200, %198 : vector<8x128xf32>
    %202 = arith.mulf %192, %171 : vector<8x128xf32>
    %203 = arith.addf %201, %202 : vector<8x128xf32>
    %204 = arith.addi %17, %c4_i32 : i32
    %205 = vector.broadcast %204 : i32 to vector<8x1xi32>
    %206 = arith.cmpi slt, %205, %16 : vector<8x1xi32>
    %207 = vector.shape_cast %206 : vector<8x1xi1> to vector<8x1xi1>
    %208 = vector.broadcast %207 : vector<8x1xi1> to vector<8x128xi1>
    %209 = arith.select %208, %203, %171 : vector<8x128xi1>, vector<8x128xf32>
    %c5_i32 = arith.constant 5 : i32
    %c8_i32_50 = arith.constant 8 : i32
    %210 = arith.muli %c5_i32, %c8_i32_50 : i32
    %211 = tpu.assume_multiple %210, 8 : i32
    %212 = arith.index_cast %211 : i32 to index
    %c0_51 = arith.constant 0 : index
    %213 = vector.load %arg9[%212, %c0_51] : memref<64x384xf32, #tpu.memory_space<vmem>>, vector<8x384xf32>
    %cst_52 = arith.constant dense<0.000000e+00> : vector<8x384xf32>
    %214 = tpu.matmul %209, %11, %cst_52 {dimension_numbers = #tpu.dot_dimension_numbers<[1], [0], [0], [1], [0, 0, 1, 1], [], []>} : vector<8x128xf32>, vector<128x384xf32>, vector<8x384xf32> -> vector<8x384xf32>
    %215 = vector.extract_strided_slice %213 {offsets = [0, 0], sizes = [8, 128], strides = [1, 1]} : vector<8x384xf32> to vector<8x128xf32>
    %216 = vector.extract_strided_slice %214 {offsets = [0, 0], sizes = [8, 128], strides = [1, 1]} : vector<8x384xf32> to vector<8x128xf32>
    %217 = arith.addf %215, %216 : vector<8x128xf32>
    %218 = arith.negf %217 : vector<8x128xf32>
    %219 = math.exp %218 : vector<8x128xf32>
    %cst_53 = arith.constant 1.000000e+00 : f32
    %220 = vector.broadcast %cst_53 : f32 to vector<8x128xf32>
    %221 = arith.addf %220, %219 : vector<8x128xf32>
    %222 = arith.divf %220, %221 : vector<8x128xf32>
    %223 = vector.extract_strided_slice %213 {offsets = [0, 128], sizes = [8, 128], strides = [1, 1]} : vector<8x384xf32> to vector<8x128xf32>
    %224 = vector.extract_strided_slice %214 {offsets = [0, 128], sizes = [8, 128], strides = [1, 1]} : vector<8x384xf32> to vector<8x128xf32>
    %225 = arith.addf %223, %224 : vector<8x128xf32>
    %226 = arith.negf %225 : vector<8x128xf32>
    %227 = math.exp %226 : vector<8x128xf32>
    %cst_54 = arith.constant 1.000000e+00 : f32
    %228 = vector.broadcast %cst_54 : f32 to vector<8x128xf32>
    %229 = arith.addf %228, %227 : vector<8x128xf32>
    %230 = arith.divf %228, %229 : vector<8x128xf32>
    %231 = vector.extract_strided_slice %213 {offsets = [0, 256], sizes = [8, 128], strides = [1, 1]} : vector<8x384xf32> to vector<8x128xf32>
    %232 = vector.extract_strided_slice %214 {offsets = [0, 256], sizes = [8, 128], strides = [1, 1]} : vector<8x384xf32> to vector<8x128xf32>
    %233 = arith.addf %232, %14 : vector<8x128xf32>
    %234 = arith.mulf %222, %233 : vector<8x128xf32>
    %235 = arith.addf %231, %234 : vector<8x128xf32>
    %236 = math.tanh %235 : vector<8x128xf32>
    %cst_55 = arith.constant 1.000000e+00 : f32
    %237 = vector.broadcast %cst_55 : f32 to vector<8x128xf32>
    %238 = arith.subf %237, %230 : vector<8x128xf32>
    %239 = arith.mulf %238, %236 : vector<8x128xf32>
    %240 = arith.mulf %230, %209 : vector<8x128xf32>
    %241 = arith.addf %239, %240 : vector<8x128xf32>
    %242 = arith.addi %17, %c5_i32 : i32
    %243 = vector.broadcast %242 : i32 to vector<8x1xi32>
    %244 = arith.cmpi slt, %243, %16 : vector<8x1xi32>
    %245 = vector.shape_cast %244 : vector<8x1xi1> to vector<8x1xi1>
    %246 = vector.broadcast %245 : vector<8x1xi1> to vector<8x128xi1>
    %247 = arith.select %246, %241, %209 : vector<8x128xi1>, vector<8x128xf32>
    %c6_i32 = arith.constant 6 : i32
    %c8_i32_56 = arith.constant 8 : i32
    %248 = arith.muli %c6_i32, %c8_i32_56 : i32
    %249 = tpu.assume_multiple %248, 8 : i32
    %250 = arith.index_cast %249 : i32 to index
    %c0_57 = arith.constant 0 : index
    %251 = vector.load %arg9[%250, %c0_57] : memref<64x384xf32, #tpu.memory_space<vmem>>, vector<8x384xf32>
    %cst_58 = arith.constant dense<0.000000e+00> : vector<8x384xf32>
    %252 = tpu.matmul %247, %11, %cst_58 {dimension_numbers = #tpu.dot_dimension_numbers<[1], [0], [0], [1], [0, 0, 1, 1], [], []>} : vector<8x128xf32>, vector<128x384xf32>, vector<8x384xf32> -> vector<8x384xf32>
    %253 = vector.extract_strided_slice %251 {offsets = [0, 0], sizes = [8, 128], strides = [1, 1]} : vector<8x384xf32> to vector<8x128xf32>
    %254 = vector.extract_strided_slice %252 {offsets = [0, 0], sizes = [8, 128], strides = [1, 1]} : vector<8x384xf32> to vector<8x128xf32>
    %255 = arith.addf %253, %254 : vector<8x128xf32>
    %256 = arith.negf %255 : vector<8x128xf32>
    %257 = math.exp %256 : vector<8x128xf32>
    %cst_59 = arith.constant 1.000000e+00 : f32
    %258 = vector.broadcast %cst_59 : f32 to vector<8x128xf32>
    %259 = arith.addf %258, %257 : vector<8x128xf32>
    %260 = arith.divf %258, %259 : vector<8x128xf32>
    %261 = vector.extract_strided_slice %251 {offsets = [0, 128], sizes = [8, 128], strides = [1, 1]} : vector<8x384xf32> to vector<8x128xf32>
    %262 = vector.extract_strided_slice %252 {offsets = [0, 128], sizes = [8, 128], strides = [1, 1]} : vector<8x384xf32> to vector<8x128xf32>
    %263 = arith.addf %261, %262 : vector<8x128xf32>
    %264 = arith.negf %263 : vector<8x128xf32>
    %265 = math.exp %264 : vector<8x128xf32>
    %cst_60 = arith.constant 1.000000e+00 : f32
    %266 = vector.broadcast %cst_60 : f32 to vector<8x128xf32>
    %267 = arith.addf %266, %265 : vector<8x128xf32>
    %268 = arith.divf %266, %267 : vector<8x128xf32>
    %269 = vector.extract_strided_slice %251 {offsets = [0, 256], sizes = [8, 128], strides = [1, 1]} : vector<8x384xf32> to vector<8x128xf32>
    %270 = vector.extract_strided_slice %252 {offsets = [0, 256], sizes = [8, 128], strides = [1, 1]} : vector<8x384xf32> to vector<8x128xf32>
    %271 = arith.addf %270, %14 : vector<8x128xf32>
    %272 = arith.mulf %260, %271 : vector<8x128xf32>
    %273 = arith.addf %269, %272 : vector<8x128xf32>
    %274 = math.tanh %273 : vector<8x128xf32>
    %cst_61 = arith.constant 1.000000e+00 : f32
    %275 = vector.broadcast %cst_61 : f32 to vector<8x128xf32>
    %276 = arith.subf %275, %268 : vector<8x128xf32>
    %277 = arith.mulf %276, %274 : vector<8x128xf32>
    %278 = arith.mulf %268, %247 : vector<8x128xf32>
    %279 = arith.addf %277, %278 : vector<8x128xf32>
    %280 = arith.addi %17, %c6_i32 : i32
    %281 = vector.broadcast %280 : i32 to vector<8x1xi32>
    %282 = arith.cmpi slt, %281, %16 : vector<8x1xi32>
    %283 = vector.shape_cast %282 : vector<8x1xi1> to vector<8x1xi1>
    %284 = vector.broadcast %283 : vector<8x1xi1> to vector<8x128xi1>
    %285 = arith.select %284, %279, %247 : vector<8x128xi1>, vector<8x128xf32>
    %c7_i32 = arith.constant 7 : i32
    %c8_i32_62 = arith.constant 8 : i32
    %286 = arith.muli %c7_i32, %c8_i32_62 : i32
    %287 = tpu.assume_multiple %286, 8 : i32
    %288 = arith.index_cast %287 : i32 to index
    %c0_63 = arith.constant 0 : index
    %289 = vector.load %arg9[%288, %c0_63] : memref<64x384xf32, #tpu.memory_space<vmem>>, vector<8x384xf32>
    %cst_64 = arith.constant dense<0.000000e+00> : vector<8x384xf32>
    %290 = tpu.matmul %285, %11, %cst_64 {dimension_numbers = #tpu.dot_dimension_numbers<[1], [0], [0], [1], [0, 0, 1, 1], [], []>} : vector<8x128xf32>, vector<128x384xf32>, vector<8x384xf32> -> vector<8x384xf32>
    %291 = vector.extract_strided_slice %289 {offsets = [0, 0], sizes = [8, 128], strides = [1, 1]} : vector<8x384xf32> to vector<8x128xf32>
    %292 = vector.extract_strided_slice %290 {offsets = [0, 0], sizes = [8, 128], strides = [1, 1]} : vector<8x384xf32> to vector<8x128xf32>
    %293 = arith.addf %291, %292 : vector<8x128xf32>
    %294 = arith.negf %293 : vector<8x128xf32>
    %295 = math.exp %294 : vector<8x128xf32>
    %cst_65 = arith.constant 1.000000e+00 : f32
    %296 = vector.broadcast %cst_65 : f32 to vector<8x128xf32>
    %297 = arith.addf %296, %295 : vector<8x128xf32>
    %298 = arith.divf %296, %297 : vector<8x128xf32>
    %299 = vector.extract_strided_slice %289 {offsets = [0, 128], sizes = [8, 128], strides = [1, 1]} : vector<8x384xf32> to vector<8x128xf32>
    %300 = vector.extract_strided_slice %290 {offsets = [0, 128], sizes = [8, 128], strides = [1, 1]} : vector<8x384xf32> to vector<8x128xf32>
    %301 = arith.addf %299, %300 : vector<8x128xf32>
    %302 = arith.negf %301 : vector<8x128xf32>
    %303 = math.exp %302 : vector<8x128xf32>
    %cst_66 = arith.constant 1.000000e+00 : f32
    %304 = vector.broadcast %cst_66 : f32 to vector<8x128xf32>
    %305 = arith.addf %304, %303 : vector<8x128xf32>
    %306 = arith.divf %304, %305 : vector<8x128xf32>
    %307 = vector.extract_strided_slice %289 {offsets = [0, 256], sizes = [8, 128], strides = [1, 1]} : vector<8x384xf32> to vector<8x128xf32>
    %308 = vector.extract_strided_slice %290 {offsets = [0, 256], sizes = [8, 128], strides = [1, 1]} : vector<8x384xf32> to vector<8x128xf32>
    %309 = arith.addf %308, %14 : vector<8x128xf32>
    %310 = arith.mulf %298, %309 : vector<8x128xf32>
    %311 = arith.addf %307, %310 : vector<8x128xf32>
    %312 = math.tanh %311 : vector<8x128xf32>
    %cst_67 = arith.constant 1.000000e+00 : f32
    %313 = vector.broadcast %cst_67 : f32 to vector<8x128xf32>
    %314 = arith.subf %313, %306 : vector<8x128xf32>
    %315 = arith.mulf %314, %312 : vector<8x128xf32>
    %316 = arith.mulf %306, %285 : vector<8x128xf32>
    %317 = arith.addf %315, %316 : vector<8x128xf32>
    %318 = arith.addi %17, %c7_i32 : i32
    %319 = vector.broadcast %318 : i32 to vector<8x1xi32>
    %320 = arith.cmpi slt, %319, %16 : vector<8x1xi32>
    %321 = vector.shape_cast %320 : vector<8x1xi1> to vector<8x1xi1>
    %322 = vector.broadcast %321 : vector<8x1xi1> to vector<8x128xi1>
    %323 = arith.select %322, %317, %285 : vector<8x128xi1>, vector<8x128xf32>
    %c8_i32_68 = arith.constant 8 : i32
    %c0_69 = arith.constant 0 : index
    %c0_70 = arith.constant 0 : index
    %c0_71 = arith.constant 0 : index
    %324 = vector.load %arg8[%c0_69, %c0_70, %c0_71] : memref<1x8x128xf32, #tpu.memory_space<vmem>>, vector<1x8x128xf32>
    %325 = vector.shape_cast %324 : vector<1x8x128xf32> to vector<8x128xf32>
    %326 = vector.shape_cast %323 : vector<8x128xf32> to vector<1x8x128xf32>
    tpu.vector_store %arg8[%c0_69, %c0_70, %c0_71], %326 {strides = array<i32>} : memref<1x8x128xf32, #tpu.memory_space<vmem>>, vector<1x8x128xf32>,
    return
  }
  func.func @transform_0(%arg0: i32, %arg1: i32) -> (i32, i32, i32) {
    %c0_i32 = arith.constant 0 : i32
    %c0_i32_0 = arith.constant 0 : i32
    return %arg0, %arg1, %c0_i32 : i32, i32, i32
  }
  func.func @transform_1(%arg0: i32, %arg1: i32) -> (i32, i32, i32) {
    %c0_i32 = arith.constant 0 : i32
    %c0_i32_0 = arith.constant 0 : i32
    %c0_i32_1 = arith.constant 0 : i32
    return %arg0, %c0_i32, %c0_i32_0 : i32, i32, i32
  }
  func.func @transform_2(%arg0: i32, %arg1: i32) -> (i32, i32) {
    %c0_i32 = arith.constant 0 : i32
    %c0_i32_0 = arith.constant 0 : i32
    %c0_i32_1 = arith.constant 0 : i32
    return %c0_i32, %c0_i32_0 : i32, i32
  }
  func.func @transform_3(%arg0: i32, %arg1: i32) -> (i32, i32) {
    %c0_i32 = arith.constant 0 : i32
    %c0_i32_0 = arith.constant 0 : i32
    %c0_i32_1 = arith.constant 0 : i32
    return %c0_i32, %c0_i32_0 : i32, i32
  }
  func.func @transform_4(%arg0: i32, %arg1: i32) -> (i32, i32) {
    %c0_i32 = arith.constant 0 : i32
    %c0_i32_0 = arith.constant 0 : i32
    %c0_i32_1 = arith.constant 0 : i32
    return %c0_i32, %c0_i32_0 : i32, i32
  }
  func.func @transform_5(%arg0: i32, %arg1: i32) -> (i32, i32) {
    %c0_i32 = arith.constant 0 : i32
    %c0_i32_0 = arith.constant 0 : i32
    %c0_i32_1 = arith.constant 0 : i32
    return %c0_i32, %c0_i32_0 : i32, i32
  }
  func.func @transform_6(%arg0: i32, %arg1: i32) -> (i32, i32, i32) {
    %c0_i32 = arith.constant 0 : i32
    %c0_i32_0 = arith.constant 0 : i32
    %c0_i32_1 = arith.constant 0 : i32
    return %arg0, %c0_i32, %c0_i32_0 : i32, i32, i32
  }
}

</mosaic_0001>

<llo_original>
// kernel: tpu_custom_call.1
$region0: #{tpu_custom_call.1}
  #allocation0 [shape = 'u32[]', space=smem, size = 0x4, offset = 0x4, fixed_abs, tag = 'smem constant byte address 0x4 - core index']
  #allocation1 [shape = 'u32[72,128]{1,0:T(1,128)}', space=vmem, size = 0x9000, scoped, tag = 'internal scratch']
  #allocation2 [shape = 'f32[64,384]{1,0:T(8,128)}', space=vmem, size = 0x18000, scoped, tag = 'scratch operand']
  %s0 = inlined_call_operand.vmem [shape: f32[1,64,16], index: 0, kind: input, shape index: {}]
  %s1 = inlined_call_operand.vmem [shape: s32[1,8,1], index: 1, kind: input, shape index: {}]
  %s2 = inlined_call_operand.vmem [shape: f32[16,384], index: 2, kind: input, shape index: {}]
  %s3 = inlined_call_operand.hbm [shape: f32[128,384], index: 3, kind: input, shape index: {}]
  %s4 = inlined_call_operand.vmem [shape: f32[1,384], index: 4, kind: input, shape index: {}]
  %s5 = inlined_call_operand.vmem [shape: f32[1,128], index: 5, kind: input, shape index: {}]
  %s6 = inlined_call_operand.hbm [shape: f32[1,8,128], index: 6, kind: output, shape index: {}]
  %s7 = sld [smem:[#allocation0]]
  $region42: #{tpu_custom_call.1} parent=0
    _
  %s9 = ssub.s32 1, %s7
  %s10 = scalar_select 0, %s9, %s7
  $region1: #{tpu_custom_call.1} parent=0
    #allocation3 [shape = 'u8[196608]{0}', space=vmem, size = 0x30000, scoped, tag = 'input window, operand 3, single buffered']
    #allocation4 [shape = 's32[1]{0}', space=sflag, size = 0x4, scoped, tag = 'scoped memory for tpu_custom_call.1']
    #allocation5 [shape = 's32[1]{0}', space=sflag, size = 0x4, scoped, tag = 'scoped memory for tpu_custom_call.1']
    #allocation6 [shape = 'u8[4096]{0}', space=vmem, size = 0x1000, scoped, tag = 'output window, operand 0, single buffered']
    %11 = vsyncpa [#allocation4], 0
    %12 = vsyncpa [#allocation5], 0
    // Predicated region
    $region2: #{tpu_custom_call.1} parent=1 // pred_check
      _
    $region3: #{tpu_custom_call.1} parent=1 // pred_check_branch
      %14 = sbr.rel (0) target = $region5
    $region4: #{tpu_custom_call.1} parent=1 // pred_region
      _
    $region5: #{tpu_custom_call.1} parent=1 // pred_fallthru
      _
    // Predicated region
    $region6: #{tpu_custom_call.1} parent=1 // pred_check
      _
    $region7: #{tpu_custom_call.1} parent=1 // pred_check_branch
      %16 = sbr.rel (0) target = $region9
    $region8: #{tpu_custom_call.1} parent=1 // pred_region
      _
    $region9: #{tpu_custom_call.1} parent=1 // pred_fallthru
      _
    // Predicated region
    $region10: #{tpu_custom_call.1} parent=1 // pred_check
      _
    $region11: #{tpu_custom_call.1} parent=1 // pred_check_branch
      %18 = sbr.rel (0) target = $region13
    $region12: #{tpu_custom_call.1} parent=1 // pred_region
      _
    $region13: #{tpu_custom_call.1} parent=1 // pred_fallthru
      _
    // Predicated region
    $region14: #{tpu_custom_call.1} parent=1 // pred_check
      _
    $region15: #{tpu_custom_call.1} parent=1 // pred_check_branch
      %20 = sbr.rel (0) target = $region17
    $region16: #{tpu_custom_call.1} parent=1 // pred_region
      %22 = vsyncadd [#allocation4], 0
      %s23 = sshll.u32 %s3, 4
      %s24 = int_to_ptr.hbm [resolvable:$true] %s23
      %s25 = sshll.u32 [#allocation3], 4
      %s26 = int_to_ptr.vmem [resolvable:$true] %s25
      %31 = dma.hbm_to_vmem [thread:$0]  %s24, 6144, %s26, [#allocation4], 384, 384, 24
    $region17: #{tpu_custom_call.1} parent=1 // pred_fallthru
      _
    // Predicated region
    $region18: #{tpu_custom_call.1} parent=1 // pred_check
      _
    $region19: #{tpu_custom_call.1} parent=1 // pred_check_branch
      %33 = sbr.rel (0) target = $region21
    $region20: #{tpu_custom_call.1} parent=1 // pred_region
      _
    $region21: #{tpu_custom_call.1} parent=1 // pred_fallthru
      _
    // Predicated region
    $region22: #{tpu_custom_call.1} parent=1 // pred_check
      _
    $region23: #{tpu_custom_call.1} parent=1 // pred_check_branch
      %35 = sbr.rel (0) target = $region25
    $region24: #{tpu_custom_call.1} parent=1 // pred_region
      _
    $region25: #{tpu_custom_call.1} parent=1 // pred_fallthru
      _
    // Predicated region
    $region26: #{tpu_custom_call.1} parent=1 // pred_check
      _
    $region27: #{tpu_custom_call.1} parent=1 // pred_check_branch
      %37 = sbr.rel (0) target = $region29
    $region28: #{tpu_custom_call.1} parent=1 // pred_region
      %39 = dma.done [#allocation4], 6144
    $region29: #{tpu_custom_call.1} parent=1 // pred_fallthru
      _
    %p40 = scmp.eq.s32.totalorder 0, 0
    // Predicated region
    $region30: #{tpu_custom_call.1} parent=1 // pred_check
      %p41 = pneg %p40
    $region31: #{tpu_custom_call.1} parent=1 // pred_check_branch
      %43 = sbr.rel (%p41) target = $region33
    $region32: #{tpu_custom_call.1} parent=1 // pred_region
      %44 = vst [vmem:[#allocation6] sm:$0xff] 0.0
    $region33: #{tpu_custom_call.1} parent=1 // pred_fallthru
      _
    %v45 = vld [vmem:[%s0] sm:$0xff]
    %v46 = vld [vmem:[%s0 + $0x8] sm:$0xff]
    %v47 = vld [vmem:[%s0 + $0x10] sm:$0xff]
    %v48 = vld [vmem:[%s0 + $0x18] sm:$0xff]
    %v49 = vld [vmem:[%s0 + $0x20] sm:$0xff]
    %v50 = vld [vmem:[%s0 + $0x28] sm:$0xff]
    %v51 = vld [vmem:[%s0 + $0x30] sm:$0xff]
    %v52 = vld [vmem:[%s0 + $0x38] sm:$0xff]
    %v53 = vld [vmem:[%s2] sm:$0xff]
    %v54 = vld [vmem:[%s2 + $0x8] sm:$0xff]
    %v55 = vld [vmem:[%s2 + $0x10] sm:$0xff]
    %v56 = vld [vmem:[%s2 + $0x18] sm:$0xff]
    %v57 = vld [vmem:[%s2 + $0x20] sm:$0xff]
    %v58 = vld [vmem:[%s2 + $0x28] sm:$0xff]
    %v59 = vld [vmem:[%s4] sm:$0x7]
    %v61 = vperm.slane %v59, 0
    %v62 = vperm.slane %v59, 1
    %v63 = vperm.slane %v59, 2
    %vm67 = vcmask 130048
    %v69 = vsel %vm67, %v45, 0
    %v72 = vsel %vm67, %v46, 0
    %v75 = vsel %vm67, %v47, 0
    %v78 = vsel %vm67, %v48, 0
    %v81 = vsel %vm67, %v49, 0
    %v84 = vsel %vm67, %v50, 0
    %v87 = vsel %vm67, %v51, 0
    %v90 = vsel %vm67, %v52, 0
    %92 = vmatpush.msra.mxu0 0.0
    %93 = vmatpush.msra.mxu0 0.0
    %94 = vmatpush.msra.mxu0 0.0
    %95 = vmatpush.msra.mxu0 0.0
    %96 = vmatpush.msra.mxu0 0.0
    %97 = vmatpush.msra.mxu0 0.0
    %98 = vmatpush.msra.mxu0 0.0
    %99 = vmatpush.msra.mxu0 0.0
    %100 = vmatpush.msra.mxu0 0.0
    %101 = vmatpush.msra.mxu0 0.0
    %102 = vmatpush.msra.mxu0 0.0
    %103 = vmatpush.msra.mxu0 0.0
    %104 = vmatpush.msra.mxu0 0.0
    %105 = vmatpush.msra.mxu0 0.0
    %106 = vmatpush.msra.mxu0 %v56
    %107 = vmatpush.msra.mxu0 %v53
    %108 = vmatmul.f32.gmra.mxu0 %v69
    %v109 = vpop.f32.mrf.mxu0
    %v110 = vadd.f32 %v61, %v109
    %111 = vmatmul.f32.gmra.mxu0 %v72
    %v112 = vpop.f32.mrf.mxu0
    %v113 = vadd.f32 %v61, %v112
    %114 = vmatmul.f32.gmra.mxu0 %v75
    %v115 = vpop.f32.mrf.mxu0
    %v116 = vadd.f32 %v61, %v115
    %117 = vmatmul.f32.gmra.mxu0 %v78
    %v118 = vpop.f32.mrf.mxu0
    %v119 = vadd.f32 %v61, %v118
    %120 = vmatmul.f32.gmra.mxu0 %v81
    %v121 = vpop.f32.mrf.mxu0
    %v122 = vadd.f32 %v61, %v121
    %123 = vmatmul.f32.gmra.mxu0 %v84
    %v124 = vpop.f32.mrf.mxu0
    %v125 = vadd.f32 %v61, %v124
    %126 = vmatmul.f32.gmra.mxu0 %v87
    %v127 = vpop.f32.mrf.mxu0
    %v128 = vadd.f32 %v61, %v127
    %129 = vmatmul.f32.gmra.mxu0 %v90
    %v130 = vpop.f32.mrf.mxu0
    %v131 = vadd.f32 %v61, %v130
    %132 = vdwg.mxu0
    %133 = vmatpush.msra.mxu0 0.0
    %134 = vmatpush.msra.mxu0 0.0
    %135 = vmatpush.msra.mxu0 0.0
    %136 = vmatpush.msra.mxu0 0.0
    %137 = vmatpush.msra.mxu0 0.0
    %138 = vmatpush.msra.mxu0 0.0
    %139 = vmatpush.msra.mxu0 0.0
    %140 = vmatpush.msra.mxu0 0.0
    %141 = vmatpush.msra.mxu0 0.0
    %142 = vmatpush.msra.mxu0 0.0
    %143 = vmatpush.msra.mxu0 0.0
    %144 = vmatpush.msra.mxu0 0.0
    %145 = vmatpush.msra.mxu0 0.0
    %146 = vmatpush.msra.mxu0 0.0
    %147 = vmatpush.msra.mxu0 %v57
    %148 = vmatpush.msra.mxu0 %v54
    %149 = vmatmul.f32.gmra.mxu0 %v69
    %v150 = vpop.f32.mrf.mxu0
    %v151 = vadd.f32 %v62, %v150
    %152 = vmatmul.f32.gmra.mxu0 %v72
    %v153 = vpop.f32.mrf.mxu0
    %v154 = vadd.f32 %v62, %v153
    %155 = vmatmul.f32.gmra.mxu0 %v75
    %v156 = vpop.f32.mrf.mxu0
    %v157 = vadd.f32 %v62, %v156
    %158 = vmatmul.f32.gmra.mxu0 %v78
    %v159 = vpop.f32.mrf.mxu0
    %v160 = vadd.f32 %v62, %v159
    %161 = vmatmul.f32.gmra.mxu0 %v81
    %v162 = vpop.f32.mrf.mxu0
    %v163 = vadd.f32 %v62, %v162
    %164 = vmatmul.f32.gmra.mxu0 %v84
    %v165 = vpop.f32.mrf.mxu0
    %v166 = vadd.f32 %v62, %v165
    %167 = vmatmul.f32.gmra.mxu0 %v87
    %v168 = vpop.f32.mrf.mxu0
    %v169 = vadd.f32 %v62, %v168
    %170 = vmatmul.f32.gmra.mxu0 %v90
    %v171 = vpop.f32.mrf.mxu0
    %v172 = vadd.f32 %v62, %v171
    %173 = vdwg.mxu0
    %174 = vmatpush.msra.mxu0 0.0
    %175 = vmatpush.msra.mxu0 0.0
    %176 = vmatpush.msra.mxu0 0.0
    %177 = vmatpush.msra.mxu0 0.0
    %178 = vmatpush.msra.mxu0 0.0
    %179 = vmatpush.msra.mxu0 0.0
    %180 = vmatpush.msra.mxu0 0.0
    %181 = vmatpush.msra.mxu0 0.0
    %182 = vmatpush.msra.mxu0 0.0
    %183 = vmatpush.msra.mxu0 0.0
    %184 = vmatpush.msra.mxu0 0.0
    %185 = vmatpush.msra.mxu0 0.0
    %186 = vmatpush.msra.mxu0 0.0
    %187 = vmatpush.msra.mxu0 0.0
    %188 = vmatpush.msra.mxu0 %v58
    %189 = vmatpush.msra.mxu0 %v55
    %190 = vmatmul.f32.gmra.mxu0 %v69
    %v191 = vpop.f32.mrf.mxu0
    %v192 = vadd.f32 %v63, %v191
    %193 = vmatmul.f32.gmra.mxu0 %v72
    %v194 = vpop.f32.mrf.mxu0
    %v195 = vadd.f32 %v63, %v194
    %196 = vmatmul.f32.gmra.mxu0 %v75
    %v197 = vpop.f32.mrf.mxu0
    %v198 = vadd.f32 %v63, %v197
    %199 = vmatmul.f32.gmra.mxu0 %v78
    %v200 = vpop.f32.mrf.mxu0
    %v201 = vadd.f32 %v63, %v200
    %202 = vmatmul.f32.gmra.mxu0 %v81
    %v203 = vpop.f32.mrf.mxu0
    %v204 = vadd.f32 %v63, %v203
    %205 = vmatmul.f32.gmra.mxu0 %v84
    %v206 = vpop.f32.mrf.mxu0
    %v207 = vadd.f32 %v63, %v206
    %208 = vmatmul.f32.gmra.mxu0 %v87
    %v209 = vpop.f32.mrf.mxu0
    %v210 = vadd.f32 %v63, %v209
    %211 = vmatmul.f32.gmra.mxu0 %v90
    %v212 = vpop.f32.mrf.mxu0
    %v213 = vadd.f32 %v63, %v212
    %214 = vdwg.mxu0
    %215 = vst [vmem:[#allocation2] sm:$0xff] %v110
    %216 = vst [vmem:[#allocation2 + $0x8] sm:$0xff] %v151
    %217 = vst [vmem:[#allocation2 + $0x10] sm:$0xff] %v192
    %218 = vst [vmem:[#allocation2 + $0x18] sm:$0xff] %v113
    %219 = vst [vmem:[#allocation2 + $0x20] sm:$0xff] %v154
    %220 = vst [vmem:[#allocation2 + $0x28] sm:$0xff] %v195
    %221 = vst [vmem:[#allocation2 + $0x30] sm:$0xff] %v116
    %222 = vst [vmem:[#allocation2 + $0x38] sm:$0xff] %v157
    %223 = vst [vmem:[#allocation2 + $0x40] sm:$0xff] %v198
    %224 = vst [vmem:[#allocation2 + $0x48] sm:$0xff] %v119
    %225 = vst [vmem:[#allocation2 + $0x50] sm:$0xff] %v160
    %226 = vst [vmem:[#allocation2 + $0x58] sm:$0xff] %v201
    %227 = vst [vmem:[#allocation2 + $0x60] sm:$0xff] %v122
    %228 = vst [vmem:[#allocation2 + $0x68] sm:$0xff] %v163
    %229 = vst [vmem:[#allocation2 + $0x70] sm:$0xff] %v204
    %230 = vst [vmem:[#allocation2 + $0x78] sm:$0xff] %v125
    %231 = vst [vmem:[#allocation2 + $0x80] sm:$0xff] %v166
    %232 = vst [vmem:[#allocation2 + $0x88] sm:$0xff] %v207
    %233 = vst [vmem:[#allocation2 + $0x90] sm:$0xff] %v128
    %234 = vst [vmem:[#allocation2 + $0x98] sm:$0xff] %v169
    %235 = vst [vmem:[#allocation2 + $0xa0] sm:$0xff] %v210
    %236 = vst [vmem:[#allocation2 + $0xa8] sm:$0xff] %v131
    %237 = vst [vmem:[#allocation2 + $0xb0] sm:$0xff] %v172
    %238 = vst [vmem:[#allocation2 + $0xb8] sm:$0xff] %v213
    %v239 = vld [vmem:[#allocation3] sm:$0xff]
    %v240 = vld [vmem:[#allocation3 + $0x8] sm:$0xff]
    %v241 = vld [vmem:[#allocation3 + $0x10] sm:$0xff]
    %v242 = vld [vmem:[#allocation3 + $0x18] sm:$0xff]
    %v243 = vld [vmem:[#allocation3 + $0x20] sm:$0xff]
    %v244 = vld [vmem:[#allocation3 + $0x28] sm:$0xff]
    %v245 = vld [vmem:[#allocation3 + $0x30] sm:$0xff]
    %v246 = vld [vmem:[#allocation3 + $0x38] sm:$0xff]
    %v247 = vld [vmem:[#allocation3 + $0x40] sm:$0xff]
    %v248 = vld [vmem:[#allocation3 + $0x48] sm:$0xff]
    %v249 = vld [vmem:[#allocation3 + $0x50] sm:$0xff]
    %v250 = vld [vmem:[#allocation3 + $0x58] sm:$0xff]
    %v251 = vld [vmem:[#allocation3 + $0x60] sm:$0xff]
    %v252 = vld [vmem:[#allocation3 + $0x68] sm:$0xff]
    %v253 = vld [vmem:[#allocation3 + $0x70] sm:$0xff]
    %v254 = vld [vmem:[#allocation3 + $0x78] sm:$0xff]
    %v255 = vld [vmem:[#allocation3 + $0x80] sm:$0xff]
    %v256 = vld [vmem:[#allocation3 + $0x88] sm:$0xff]
    %v257 = vld [vmem:[#allocation3 + $0x90] sm:$0xff]
    %v258 = vld [vmem:[#allocation3 + $0x98] sm:$0xff]
    %v259 = vld [vmem:[#allocation3 + $0xa0] sm:$0xff]
    %v260 = vld [vmem:[#allocation3 + $0xa8] sm:$0xff]
    %v261 = vld [vmem:[#allocation3 + $0xb0] sm:$0xff]
    %v262 = vld [vmem:[#allocation3 + $0xb8] sm:$0xff]
    %v263 = vld [vmem:[#allocation3 + $0xc0] sm:$0xff]
    %v264 = vld [vmem:[#allocation3 + $0xc8] sm:$0xff]
    %v265 = vld [vmem:[#allocation3 + $0xd0] sm:$0xff]
    %v266 = vld [vmem:[#allocation3 + $0xd8] sm:$0xff]
    %v267 = vld [vmem:[#allocation3 + $0xe0] sm:$0xff]
    %v268 = vld [vmem:[#allocation3 + $0xe8] sm:$0xff]
    %v269 = vld [vmem:[#allocation3 + $0xf0] sm:$0xff]
    %v270 = vld [vmem:[#allocation3 + $0xf8] sm:$0xff]
    %v271 = vld [vmem:[#allocation3 + $0x100] sm:$0xff]
    %v272 = vld [vmem:[#allocation3 + $0x108] sm:$0xff]
    %v273 = vld [vmem:[#allocation3 + $0x110] sm:$0xff]
    %v274 = vld [vmem:[#allocation3 + $0x118] sm:$0xff]
    %v275 = vld [vmem:[#allocation3 + $0x120] sm:$0xff]
    %v276 = vld [vmem:[#allocation3 + $0x128] sm:$0xff]
    %v277 = vld [vmem:[#allocation3 + $0x130] sm:$0xff]
    %v278 = vld [vmem:[#allocation3 + $0x138] sm:$0xff]
    %v279 = vld [vmem:[#allocation3 + $0x140] sm:$0xff]
    %v280 = vld [vmem:[#allocation3 + $0x148] sm:$0xff]
    %v281 = vld [vmem:[#allocation3 + $0x150] sm:$0xff]
    %v282 = vld [vmem:[#allocation3 + $0x158] sm:$0xff]
    %v283 = vld [vmem:[#allocation3 + $0x160] sm:$0xff]
    %v284 = vld [vmem:[#allocation3 + $0x168] sm:$0xff]
    %v285 = vld [vmem:[#allocation3 + $0x170] sm:$0xff]
    %v286 = vld [vmem:[#allocation3 + $0x178] sm:$0xff]
    %v287 = vld [vmem:[%s5] sm:$0x1]
    %v289 = vperm.slane %v287, 0
    %v291 = vld [vmem:[%s1] sm:$0xff]
    %s292 = smul.u32 0, 8
    %v293 = vld [vmem:[#allocation6] sm:$0xff]
    %s294 = smul.u32 0, 3
    %s295 = smul.addr %s294, 8
    %s296 = scalar_lea.vmem [#allocation2], %s295
    %v297 = vld [vmem:[%s296] sm:$0xff]
    %v298 = vld [vmem:[%s296 + $0x8] sm:$0xff]
    %v299 = vld [vmem:[%s296 + $0x10] sm:$0xff]
    %300 = vmatpush.msra.mxu0 %v284
    %301 = vmatpush.msra.mxu0 %v281
    %302 = vmatpush.msra.mxu0 %v278
    %303 = vmatpush.msra.mxu0 %v275
    %304 = vmatpush.msra.mxu0 %v272
    %305 = vmatpush.msra.mxu0 %v269
    %306 = vmatpush.msra.mxu0 %v266
    %307 = vmatpush.msra.mxu0 %v263
    %308 = vmatpush.msra.mxu0 %v260
    %309 = vmatpush.msra.mxu0 %v257
    %310 = vmatpush.msra.mxu0 %v254
    %311 = vmatpush.msra.mxu0 %v251
    %312 = vmatpush.msra.mxu0 %v248
    %313 = vmatpush.msra.mxu0 %v245
    %314 = vmatpush.msra.mxu0 %v242
    %315 = vmatpush.msra.mxu0 %v239
    %316 = vmatmul.f32.gmra.mxu0 %v293
    %v317 = vpop.f32.mrf.mxu0
    %v318 = vadd.f32 0.0, %v317
    %319 = vdwg.mxu0
    %320 = vmatpush.msra.mxu0 %v285
    %321 = vmatpush.msra.mxu0 %v282
    %322 = vmatpush.msra.mxu0 %v279
    %323 = vmatpush.msra.mxu0 %v276
    %324 = vmatpush.msra.mxu0 %v273
    %325 = vmatpush.msra.mxu0 %v270
    %326 = vmatpush.msra.mxu0 %v267
    %327 = vmatpush.msra.mxu0 %v264
    %328 = vmatpush.msra.mxu0 %v261
    %329 = vmatpush.msra.mxu0 %v258
    %330 = vmatpush.msra.mxu0 %v255
    %331 = vmatpush.msra.mxu0 %v252
    %332 = vmatpush.msra.mxu0 %v249
    %333 = vmatpush.msra.mxu0 %v246
    %334 = vmatpush.msra.mxu0 %v243
    %335 = vmatpush.msra.mxu0 %v240
    %336 = vmatmul.f32.gmra.mxu0 %v293
    %v337 = vpop.f32.mrf.mxu0
    %v338 = vadd.f32 0.0, %v337
    %339 = vdwg.mxu0
    %340 = vmatpush.msra.mxu0 %v286
    %341 = vmatpush.msra.mxu0 %v283
    %342 = vmatpush.msra.mxu0 %v280
    %343 = vmatpush.msra.mxu0 %v277
    %344 = vmatpush.msra.mxu0 %v274
    %345 = vmatpush.msra.mxu0 %v271
    %346 = vmatpush.msra.mxu0 %v268
    %347 = vmatpush.msra.mxu0 %v265
    %348 = vmatpush.msra.mxu0 %v262
    %349 = vmatpush.msra.mxu0 %v259
    %350 = vmatpush.msra.mxu0 %v256
    %351 = vmatpush.msra.mxu0 %v253
    %352 = vmatpush.msra.mxu0 %v250
    %353 = vmatpush.msra.mxu0 %v247
    %354 = vmatpush.msra.mxu0 %v244
    %355 = vmatpush.msra.mxu0 %v241
    %356 = vmatmul.f32.gmra.mxu0 %v293
    %v357 = vpop.f32.mrf.mxu0
    %v358 = vadd.f32 0.0, %v357
    %359 = vdwg.mxu0
    %v360 = vadd.f32 %v297, %v318
    %v361 = vxor.u32 %v360, 2147483648
    %v362 = vmul.f32 %v361, 1.442695
    %v363 = vpow.pop %v362
    %v364 = vadd.f32 %v363, 1.0
    %v365 = vrcp.pop %v364
    %v366 = vmul.f32 %v364, %v365
    %v367 = vsub.f32 1.0, %v366
    %v368 = vmul.f32 %v365, %v367
    %v369 = vadd.f32 %v365, %v368
    %vm370 = vweird.f32 %v364
    %vm371 = vweird.f32 %v365
    %vm372 = vmor %vm370, %vm371
    %v373 = vsel %vm372, %v365, %v369
    %v374 = vand.u32 2147483647, %v364
    %vm375 = vcmp.eq.f32.partialorder %v374, 8.507059e+37
    %v376 = vand.u32 %v364, 2147483648
    %v377 = vor.u32 1.1754944e-38, %v376
    %v378 = vsel %vm375, %v377, %v373
    %v379 = vmul.f32 1.0, %v378
    %v380 = vadd.f32 %v298, %v338
    %v381 = vxor.u32 %v380, 2147483648
    %v382 = vmul.f32 %v381, 1.442695
    %v383 = vpow.pop %v382
    %v384 = vadd.f32 %v383, 1.0
    %v385 = vrcp.pop %v384
    %v386 = vmul.f32 %v384, %v385
    %v387 = vsub.f32 1.0, %v386
    %v388 = vmul.f32 %v385, %v387
    %v389 = vadd.f32 %v385, %v388
    %vm390 = vweird.f32 %v384
    %vm391 = vweird.f32 %v385
    %vm392 = vmor %vm390, %vm391
    %v393 = vsel %vm392, %v385, %v389
    %v394 = vand.u32 2147483647, %v384
    %vm395 = vcmp.eq.f32.partialorder %v394, 8.507059e+37
    %v396 = vand.u32 %v384, 2147483648
    %v397 = vor.u32 1.1754944e-38, %v396
    %v398 = vsel %vm395, %v397, %v393
    %v399 = vmul.f32 1.0, %v398
    %v400 = vadd.f32 %v358, %v289
    %v401 = vmul.f32 %v379, %v400
    %v402 = vadd.f32 %v299, %v401
    %v403 = vtanh.pop %v402
    %v404 = vsub.f32 1.0, %v399
    %v405 = vmul.f32 %v404, %v403
    %v406 = vmul.f32 %v399, %v293
    %v407 = vadd.f32 %v405, %v406
    %v408 = vstv %s292
    %vm409 = vcmp.lt.s32.totalorder %v408, %v291
    %v410 = vsel %vm409, 1, 0
    %411 = vset.pattern.permute.xlu0 0
    %412 = vperm.xlu0 %411, %v410
    %v413 = vpop.permute.xlu0 %412
    %vm414 = vcmp.eq.s32.totalorder %v413, 1
    %v415 = vsel %vm414, %v407, %v293
    %s416 = smul.u32 1, 3
    %s417 = smul.addr %s416, 8
    %s418 = scalar_lea.vmem [#allocation2], %s417
    %v419 = vld [vmem:[%s418] sm:$0xff]
    %v420 = vld [vmem:[%s418 + $0x8] sm:$0xff]
    %v421 = vld [vmem:[%s418 + $0x10] sm:$0xff]
    %422 = vmatpush.msra.mxu0 %v284
    %423 = vmatpush.msra.mxu0 %v281
    %424 = vmatpush.msra.mxu0 %v278
    %425 = vmatpush.msra.mxu0 %v275
    %426 = vmatpush.msra.mxu0 %v272
    %427 = vmatpush.msra.mxu0 %v269
    %428 = vmatpush.msra.mxu0 %v266
    %429 = vmatpush.msra.mxu0 %v263
    %430 = vmatpush.msra.mxu0 %v260
    %431 = vmatpush.msra.mxu0 %v257
    %432 = vmatpush.msra.mxu0 %v254
    %433 = vmatpush.msra.mxu0 %v251
    %434 = vmatpush.msra.mxu0 %v248
    %435 = vmatpush.msra.mxu0 %v245
    %436 = vmatpush.msra.mxu0 %v242
    %437 = vmatpush.msra.mxu0 %v239
    %438 = vmatmul.f32.gmra.mxu0 %v415
    %v439 = vpop.f32.mrf.mxu0
    %v440 = vadd.f32 0.0, %v439
    %441 = vdwg.mxu0
    %442 = vmatpush.msra.mxu0 %v285
    %443 = vmatpush.msra.mxu0 %v282
    %444 = vmatpush.msra.mxu0 %v279
    %445 = vmatpush.msra.mxu0 %v276
    %446 = vmatpush.msra.mxu0 %v273
    %447 = vmatpush.msra.mxu0 %v270
    %448 = vmatpush.msra.mxu0 %v267
    %449 = vmatpush.msra.mxu0 %v264
    %450 = vmatpush.msra.mxu0 %v261
    %451 = vmatpush.msra.mxu0 %v258
    %452 = vmatpush.msra.mxu0 %v255
    %453 = vmatpush.msra.mxu0 %v252
    %454 = vmatpush.msra.mxu0 %v249
    %455 = vmatpush.msra.mxu0 %v246
    %456 = vmatpush.msra.mxu0 %v243
    %457 = vmatpush.msra.mxu0 %v240
    %458 = vmatmul.f32.gmra.mxu0 %v415
    %v459 = vpop.f32.mrf.mxu0
    %v460 = vadd.f32 0.0, %v459
    %461 = vdwg.mxu0
    %462 = vmatpush.msra.mxu0 %v286
    %463 = vmatpush.msra.mxu0 %v283
    %464 = vmatpush.msra.mxu0 %v280
    %465 = vmatpush.msra.mxu0 %v277
    %466 = vmatpush.msra.mxu0 %v274
    %467 = vmatpush.msra.mxu0 %v271
    %468 = vmatpush.msra.mxu0 %v268
    %469 = vmatpush.msra.mxu0 %v265
    %470 = vmatpush.msra.mxu0 %v262
    %471 = vmatpush.msra.mxu0 %v259
    %472 = vmatpush.msra.mxu0 %v256
    %473 = vmatpush.msra.mxu0 %v253
    %474 = vmatpush.msra.mxu0 %v250
    %475 = vmatpush.msra.mxu0 %v247
    %476 = vmatpush.msra.mxu0 %v244
    %477 = vmatpush.msra.mxu0 %v241
    %478 = vmatmul.f32.gmra.mxu0 %v415
    %v479 = vpop.f32.mrf.mxu0
    %v480 = vadd.f32 0.0, %v479
    %481 = vdwg.mxu0
    %v482 = vadd.f32 %v419, %v440
    %v483 = vxor.u32 %v482, 2147483648
    %v484 = vmul.f32 %v483, 1.442695
    %v485 = vpow.pop %v484
    %v486 = vadd.f32 %v485, 1.0
    %v487 = vrcp.pop %v486
    %v488 = vmul.f32 %v486, %v487
    %v489 = vsub.f32 1.0, %v488
    %v490 = vmul.f32 %v487, %v489
    %v491 = vadd.f32 %v487, %v490
    %vm492 = vweird.f32 %v486
    %vm493 = vweird.f32 %v487
    %vm494 = vmor %vm492, %vm493
    %v495 = vsel %vm494, %v487, %v491
    %v496 = vand.u32 2147483647, %v486
    %vm497 = vcmp.eq.f32.partialorder %v496, 8.507059e+37
    %v498 = vand.u32 %v486, 2147483648
    %v499 = vor.u32 1.1754944e-38, %v498
    %v500 = vsel %vm497, %v499, %v495
    %v501 = vmul.f32 1.0, %v500
    %v502 = vadd.f32 %v420, %v460
    %v503 = vxor.u32 %v502, 2147483648
    %v504 = vmul.f32 %v503, 1.442695
    %v505 = vpow.pop %v504
    %v506 = vadd.f32 %v505, 1.0
    %v507 = vrcp.pop %v506
    %v508 = vmul.f32 %v506, %v507
    %v509 = vsub.f32 1.0, %v508
    %v510 = vmul.f32 %v507, %v509
    %v511 = vadd.f32 %v507, %v510
    %vm512 = vweird.f32 %v506
    %vm513 = vweird.f32 %v507
    %vm514 = vmor %vm512, %vm513
    %v515 = vsel %vm514, %v507, %v511
    %v516 = vand.u32 2147483647, %v506
    %vm517 = vcmp.eq.f32.partialorder %v516, 8.507059e+37
    %v518 = vand.u32 %v506, 2147483648
    %v519 = vor.u32 1.1754944e-38, %v518
    %v520 = vsel %vm517, %v519, %v515
    %v521 = vmul.f32 1.0, %v520
    %v522 = vadd.f32 %v480, %v289
    %v523 = vmul.f32 %v501, %v522
    %v524 = vadd.f32 %v421, %v523
    %v525 = vtanh.pop %v524
    %v526 = vsub.f32 1.0, %v521
    %v527 = vmul.f32 %v526, %v525
    %v528 = vmul.f32 %v521, %v415
    %v529 = vadd.f32 %v527, %v528
    %s530 = sadd.s32 %s292, 1
    %v531 = vstv %s530
    %vm532 = vcmp.lt.s32.totalorder %v531, %v291
    %v533 = vsel %vm532, 1, 0
    %534 = vset.pattern.permute.xlu0 0
    %535 = vperm.xlu0 %534, %v533
    %v536 = vpop.permute.xlu0 %535
    %vm537 = vcmp.eq.s32.totalorder %v536, 1
    %v538 = vsel %vm537, %v529, %v415
    %s539 = smul.u32 2, 3
    %s540 = smul.addr %s539, 8
    %s541 = scalar_lea.vmem [#allocation2], %s540
    %v542 = vld [vmem:[%s541] sm:$0xff]
    %v543 = vld [vmem:[%s541 + $0x8] sm:$0xff]
    %v544 = vld [vmem:[%s541 + $0x10] sm:$0xff]
    %545 = vmatpush.msra.mxu0 %v284
    %546 = vmatpush.msra.mxu0 %v281
    %547 = vmatpush.msra.mxu0 %v278
    %548 = vmatpush.msra.mxu0 %v275
    %549 = vmatpush.msra.mxu0 %v272
    %550 = vmatpush.msra.mxu0 %v269
    %551 = vmatpush.msra.mxu0 %v266
    %552 = vmatpush.msra.mxu0 %v263
    %553 = vmatpush.msra.mxu0 %v260
    %554 = vmatpush.msra.mxu0 %v257
    %555 = vmatpush.msra.mxu0 %v254
    %556 = vmatpush.msra.mxu0 %v251
    %557 = vmatpush.msra.mxu0 %v248
    %558 = vmatpush.msra.mxu0 %v245
    %559 = vmatpush.msra.mxu0 %v242
    %560 = vmatpush.msra.mxu0 %v239
    %561 = vmatmul.f32.gmra.mxu0 %v538
    %v562 = vpop.f32.mrf.mxu0
    %v563 = vadd.f32 0.0, %v562
    %564 = vdwg.mxu0
    %565 = vmatpush.msra.mxu0 %v285
    %566 = vmatpush.msra.mxu0 %v282
    %567 = vmatpush.msra.mxu0 %v279
    %568 = vmatpush.msra.mxu0 %v276
    %569 = vmatpush.msra.mxu0 %v273
    %570 = vmatpush.msra.mxu0 %v270
    %571 = vmatpush.msra.mxu0 %v267
    %572 = vmatpush.msra.mxu0 %v264
    %573 = vmatpush.msra.mxu0 %v261
    %574 = vmatpush.msra.mxu0 %v258
    %575 = vmatpush.msra.mxu0 %v255
    %576 = vmatpush.msra.mxu0 %v252
    %577 = vmatpush.msra.mxu0 %v249
    %578 = vmatpush.msra.mxu0 %v246
    %579 = vmatpush.msra.mxu0 %v243
    %580 = vmatpush.msra.mxu0 %v240
    %581 = vmatmul.f32.gmra.mxu0 %v538
    %v582 = vpop.f32.mrf.mxu0
    %v583 = vadd.f32 0.0, %v582
    %584 = vdwg.mxu0
    %585 = vmatpush.msra.mxu0 %v286
    %586 = vmatpush.msra.mxu0 %v283
    %587 = vmatpush.msra.mxu0 %v280
    %588 = vmatpush.msra.mxu0 %v277
    %589 = vmatpush.msra.mxu0 %v274
    %590 = vmatpush.msra.mxu0 %v271
    %591 = vmatpush.msra.mxu0 %v268
    %592 = vmatpush.msra.mxu0 %v265
    %593 = vmatpush.msra.mxu0 %v262
    %594 = vmatpush.msra.mxu0 %v259
    %595 = vmatpush.msra.mxu0 %v256
    %596 = vmatpush.msra.mxu0 %v253
    %597 = vmatpush.msra.mxu0 %v250
    %598 = vmatpush.msra.mxu0 %v247
    %599 = vmatpush.msra.mxu0 %v244
    %600 = vmatpush.msra.mxu0 %v241
    %601 = vmatmul.f32.gmra.mxu0 %v538
    %v602 = vpop.f32.mrf.mxu0
    %v603 = vadd.f32 0.0, %v602
    %604 = vdwg.mxu0
    %v605 = vadd.f32 %v542, %v563
    %v606 = vxor.u32 %v605, 2147483648
    %v607 = vmul.f32 %v606, 1.442695
    %v608 = vpow.pop %v607
    %v609 = vadd.f32 %v608, 1.0
    %v610 = vrcp.pop %v609
    %v611 = vmul.f32 %v609, %v610
    %v612 = vsub.f32 1.0, %v611
    %v613 = vmul.f32 %v610, %v612
    %v614 = vadd.f32 %v610, %v613
    %vm615 = vweird.f32 %v609
    %vm616 = vweird.f32 %v610
    %vm617 = vmor %vm615, %vm616
    %v618 = vsel %vm617, %v610, %v614
    %v619 = vand.u32 2147483647, %v609
    %vm620 = vcmp.eq.f32.partialorder %v619, 8.507059e+37
    %v621 = vand.u32 %v609, 2147483648
    %v622 = vor.u32 1.1754944e-38, %v621
    %v623 = vsel %vm620, %v622, %v618
    %v624 = vmul.f32 1.0, %v623
    %v625 = vadd.f32 %v543, %v583
    %v626 = vxor.u32 %v625, 2147483648
    %v627 = vmul.f32 %v626, 1.442695
    %v628 = vpow.pop %v627
    %v629 = vadd.f32 %v628, 1.0
    %v630 = vrcp.pop %v629
    %v631 = vmul.f32 %v629, %v630
    %v632 = vsub.f32 1.0, %v631
    %v633 = vmul.f32 %v630, %v632
    %v634 = vadd.f32 %v630, %v633
    %vm635 = vweird.f32 %v629
    %vm636 = vweird.f32 %v630
    %vm637 = vmor %vm635, %vm636
    %v638 = vsel %vm637, %v630, %v634
    %v639 = vand.u32 2147483647, %v629
    %vm640 = vcmp.eq.f32.partialorder %v639, 8.507059e+37
    %v641 = vand.u32 %v629, 2147483648
    %v642 = vor.u32 1.1754944e-38, %v641
    %v643 = vsel %vm640, %v642, %v638
    %v644 = vmul.f32 1.0, %v643
    %v645 = vadd.f32 %v603, %v289
    %v646 = vmul.f32 %v624, %v645
    %v647 = vadd.f32 %v544, %v646
    %v648 = vtanh.pop %v647
    %v649 = vsub.f32 1.0, %v644
    %v650 = vmul.f32 %v649, %v648
    %v651 = vmul.f32 %v644, %v538
    %v652 = vadd.f32 %v650, %v651
    %s653 = sadd.s32 %s292, 2
    %v654 = vstv %s653
    %vm655 = vcmp.lt.s32.totalorder %v654, %v291
    %v656 = vsel %vm655, 1, 0
    %657 = vset.pattern.permute.xlu0 0
    %658 = vperm.xlu0 %657, %v656
    %v659 = vpop.permute.xlu0 %658
    %vm660 = vcmp.eq.s32.totalorder %v659, 1
    %v661 = vsel %vm660, %v652, %v538
    %s662 = smul.u32 3, 3
    %s663 = smul.addr %s662, 8
    %s664 = scalar_lea.vmem [#allocation2], %s663
    %v665 = vld [vmem:[%s664] sm:$0xff]
    %v666 = vld [vmem:[%s664 + $0x8] sm:$0xff]
    %v667 = vld [vmem:[%s664 + $0x10] sm:$0xff]
    %668 = vmatpush.msra.mxu0 %v284
    %669 = vmatpush.msra.mxu0 %v281
    %670 = vmatpush.msra.mxu0 %v278
    %671 = vmatpush.msra.mxu0 %v275
    %672 = vmatpush.msra.mxu0 %v272
    %673 = vmatpush.msra.mxu0 %v269
    %674 = vmatpush.msra.mxu0 %v266
    %675 = vmatpush.msra.mxu0 %v263
    %676 = vmatpush.msra.mxu0 %v260
    %677 = vmatpush.msra.mxu0 %v257
    %678 = vmatpush.msra.mxu0 %v254
    %679 = vmatpush.msra.mxu0 %v251
    %680 = vmatpush.msra.mxu0 %v248
    %681 = vmatpush.msra.mxu0 %v245
    %682 = vmatpush.msra.mxu0 %v242
    %683 = vmatpush.msra.mxu0 %v239
    %684 = vmatmul.f32.gmra.mxu0 %v661
    %v685 = vpop.f32.mrf.mxu0
    %v686 = vadd.f32 0.0, %v685
    %687 = vdwg.mxu0
    %688 = vmatpush.msra.mxu0 %v285
    %689 = vmatpush.msra.mxu0 %v282
    %690 = vmatpush.msra.mxu0 %v279
    %691 = vmatpush.msra.mxu0 %v276
    %692 = vmatpush.msra.mxu0 %v273
    %693 = vmatpush.msra.mxu0 %v270
    %694 = vmatpush.msra.mxu0 %v267
    %695 = vmatpush.msra.mxu0 %v264
    %696 = vmatpush.msra.mxu0 %v261
    %697 = vmatpush.msra.mxu0 %v258
    %698 = vmatpush.msra.mxu0 %v255
    %699 = vmatpush.msra.mxu0 %v252
    %700 = vmatpush.msra.mxu0 %v249
    %701 = vmatpush.msra.mxu0 %v246
    %702 = vmatpush.msra.mxu0 %v243
    %703 = vmatpush.msra.mxu0 %v240
    %704 = vmatmul.f32.gmra.mxu0 %v661
    %v705 = vpop.f32.mrf.mxu0
    %v706 = vadd.f32 0.0, %v705
    %707 = vdwg.mxu0
    %708 = vmatpush.msra.mxu0 %v286
    %709 = vmatpush.msra.mxu0 %v283
    %710 = vmatpush.msra.mxu0 %v280
    %711 = vmatpush.msra.mxu0 %v277
    %712 = vmatpush.msra.mxu0 %v274
    %713 = vmatpush.msra.mxu0 %v271
    %714 = vmatpush.msra.mxu0 %v268
    %715 = vmatpush.msra.mxu0 %v265
    %716 = vmatpush.msra.mxu0 %v262
    %717 = vmatpush.msra.mxu0 %v259
    %718 = vmatpush.msra.mxu0 %v256
    %719 = vmatpush.msra.mxu0 %v253
    %720 = vmatpush.msra.mxu0 %v250
    %721 = vmatpush.msra.mxu0 %v247
    %722 = vmatpush.msra.mxu0 %v244
    %723 = vmatpush.msra.mxu0 %v241
    %724 = vmatmul.f32.gmra.mxu0 %v661
    %v725 = vpop.f32.mrf.mxu0
    %v726 = vadd.f32 0.0, %v725
    %727 = vdwg.mxu0
    %v728 = vadd.f32 %v665, %v686
    %v729 = vxor.u32 %v728, 2147483648
    %v730 = vmul.f32 %v729, 1.442695
    %v731 = vpow.pop %v730
    %v732 = vadd.f32 %v731, 1.0
    %v733 = vrcp.pop %v732
    %v734 = vmul.f32 %v732, %v733
    %v735 = vsub.f32 1.0, %v734
    %v736 = vmul.f32 %v733, %v735
    %v737 = vadd.f32 %v733, %v736
    %vm738 = vweird.f32 %v732
    %vm739 = vweird.f32 %v733
    %vm740 = vmor %vm738, %vm739
    %v741 = vsel %vm740, %v733, %v737
    %v742 = vand.u32 2147483647, %v732
    %vm743 = vcmp.eq.f32.partialorder %v742, 8.507059e+37
    %v744 = vand.u32 %v732, 2147483648
    %v745 = vor.u32 1.1754944e-38, %v744
    %v746 = vsel %vm743, %v745, %v741
    %v747 = vmul.f32 1.0, %v746
    %v748 = vadd.f32 %v666, %v706
    %v749 = vxor.u32 %v748, 2147483648
    %v750 = vmul.f32 %v749, 1.442695
    %v751 = vpow.pop %v750
    %v752 = vadd.f32 %v751, 1.0
    %v753 = vrcp.pop %v752
    %v754 = vmul.f32 %v752, %v753
    %v755 = vsub.f32 1.0, %v754
    %v756 = vmul.f32 %v753, %v755
    %v757 = vadd.f32 %v753, %v756
    %vm758 = vweird.f32 %v752
    %vm759 = vweird.f32 %v753
    %vm760 = vmor %vm758, %vm759
    %v761 = vsel %vm760, %v753, %v757
    %v762 = vand.u32 2147483647, %v752
    %vm763 = vcmp.eq.f32.partialorder %v762, 8.507059e+37
    %v764 = vand.u32 %v752, 2147483648
    %v765 = vor.u32 1.1754944e-38, %v764
    %v766 = vsel %vm763, %v765, %v761
    %v767 = vmul.f32 1.0, %v766
    %v768 = vadd.f32 %v726, %v289
    %v769 = vmul.f32 %v747, %v768
    %v770 = vadd.f32 %v667, %v769
    %v771 = vtanh.pop %v770
    %v772 = vsub.f32 1.0, %v767
    %v773 = vmul.f32 %v772, %v771
    %v774 = vmul.f32 %v767, %v661
    %v775 = vadd.f32 %v773, %v774
    %s776 = sadd.s32 %s292, 3
    %v777 = vstv %s776
    %vm778 = vcmp.lt.s32.totalorder %v777, %v291
    %v779 = vsel %vm778, 1, 0
    %780 = vset.pattern.permute.xlu0 0
    %781 = vperm.xlu0 %780, %v779
    %v782 = vpop.permute.xlu0 %781
    %vm783 = vcmp.eq.s32.totalorder %v782, 1
    %v784 = vsel %vm783, %v775, %v661
    %s785 = smul.u32 4, 3
    %s786 = smul.addr %s785, 8
    %s787 = scalar_lea.vmem [#allocation2], %s786
    %v788 = vld [vmem:[%s787] sm:$0xff]
    %v789 = vld [vmem:[%s787 + $0x8] sm:$0xff]
    %v790 = vld [vmem:[%s787 + $0x10] sm:$0xff]
    %791 = vmatpush.msra.mxu0 %v284
    %792 = vmatpush.msra.mxu0 %v281
    %793 = vmatpush.msra.mxu0 %v278
    %794 = vmatpush.msra.mxu0 %v275
    %795 = vmatpush.msra.mxu0 %v272
    %796 = vmatpush.msra.mxu0 %v269
    %797 = vmatpush.msra.mxu0 %v266
    %798 = vmatpush.msra.mxu0 %v263
    %799 = vmatpush.msra.mxu0 %v260
    %800 = vmatpush.msra.mxu0 %v257
    %801 = vmatpush.msra.mxu0 %v254
    %802 = vmatpush.msra.mxu0 %v251
    %803 = vmatpush.msra.mxu0 %v248
    %804 = vmatpush.msra.mxu0 %v245
    %805 = vmatpush.msra.mxu0 %v242
    %806 = vmatpush.msra.mxu0 %v239
    %807 = vmatmul.f32.gmra.mxu0 %v784
    %v808 = vpop.f32.mrf.mxu0
    %v809 = vadd.f32 0.0, %v808
    %810 = vdwg.mxu0
    %811 = vmatpush.msra.mxu0 %v285
    %812 = vmatpush.msra.mxu0 %v282
    %813 = vmatpush.msra.mxu0 %v279
    %814 = vmatpush.msra.mxu0 %v276
    %815 = vmatpush.msra.mxu0 %v273
    %816 = vmatpush.msra.mxu0 %v270
    %817 = vmatpush.msra.mxu0 %v267
    %818 = vmatpush.msra.mxu0 %v264
    %819 = vmatpush.msra.mxu0 %v261
    %820 = vmatpush.msra.mxu0 %v258
    %821 = vmatpush.msra.mxu0 %v255
    %822 = vmatpush.msra.mxu0 %v252
    %823 = vmatpush.msra.mxu0 %v249
    %824 = vmatpush.msra.mxu0 %v246
    %825 = vmatpush.msra.mxu0 %v243
    %826 = vmatpush.msra.mxu0 %v240
    %827 = vmatmul.f32.gmra.mxu0 %v784
    %v828 = vpop.f32.mrf.mxu0
    %v829 = vadd.f32 0.0, %v828
    %830 = vdwg.mxu0
    %831 = vmatpush.msra.mxu0 %v286
    %832 = vmatpush.msra.mxu0 %v283
    %833 = vmatpush.msra.mxu0 %v280
    %834 = vmatpush.msra.mxu0 %v277
    %835 = vmatpush.msra.mxu0 %v274
    %836 = vmatpush.msra.mxu0 %v271
    %837 = vmatpush.msra.mxu0 %v268
    %838 = vmatpush.msra.mxu0 %v265
    %839 = vmatpush.msra.mxu0 %v262
    %840 = vmatpush.msra.mxu0 %v259
    %841 = vmatpush.msra.mxu0 %v256
    %842 = vmatpush.msra.mxu0 %v253
    %843 = vmatpush.msra.mxu0 %v250
    %844 = vmatpush.msra.mxu0 %v247
    %845 = vmatpush.msra.mxu0 %v244
    %846 = vmatpush.msra.mxu0 %v241
    %847 = vmatmul.f32.gmra.mxu0 %v784
    %v848 = vpop.f32.mrf.mxu0
    %v849 = vadd.f32 0.0, %v848
    %850 = vdwg.mxu0
    %v851 = vadd.f32 %v788, %v809
    %v852 = vxor.u32 %v851, 2147483648
    %v853 = vmul.f32 %v852, 1.442695
    %v854 = vpow.pop %v853
    %v855 = vadd.f32 %v854, 1.0
    %v856 = vrcp.pop %v855
    %v857 = vmul.f32 %v855, %v856
    %v858 = vsub.f32 1.0, %v857
    %v859 = vmul.f32 %v856, %v858
    %v860 = vadd.f32 %v856, %v859
    %vm861 = vweird.f32 %v855
    %vm862 = vweird.f32 %v856
    %vm863 = vmor %vm861, %vm862
    %v864 = vsel %vm863, %v856, %v860
    %v865 = vand.u32 2147483647, %v855
    %vm866 = vcmp.eq.f32.partialorder %v865, 8.507059e+37
    %v867 = vand.u32 %v855, 2147483648
    %v868 = vor.u32 1.1754944e-38, %v867
    %v869 = vsel %vm866, %v868, %v864
    %v870 = vmul.f32 1.0, %v869
    %v871 = vadd.f32 %v789, %v829
    %v872 = vxor.u32 %v871, 2147483648
    %v873 = vmul.f32 %v872, 1.442695
    %v874 = vpow.pop %v873
    %v875 = vadd.f32 %v874, 1.0
    %v876 = vrcp.pop %v875
    %v877 = vmul.f32 %v875, %v876
    %v878 = vsub.f32 1.0, %v877
    %v879 = vmul.f32 %v876, %v878
    %v880 = vadd.f32 %v876, %v879
    %vm881 = vweird.f32 %v875
    %vm882 = vweird.f32 %v876
    %vm883 = vmor %vm881, %vm882
    %v884 = vsel %vm883, %v876, %v880
    %v885 = vand.u32 2147483647, %v875
    %vm886 = vcmp.eq.f32.partialorder %v885, 8.507059e+37
    %v887 = vand.u32 %v875, 2147483648
    %v888 = vor.u32 1.1754944e-38, %v887
    %v889 = vsel %vm886, %v888, %v884
    %v890 = vmul.f32 1.0, %v889
    %v891 = vadd.f32 %v849, %v289
    %v892 = vmul.f32 %v870, %v891
    %v893 = vadd.f32 %v790, %v892
    %v894 = vtanh.pop %v893
    %v895 = vsub.f32 1.0, %v890
    %v896 = vmul.f32 %v895, %v894
    %v897 = vmul.f32 %v890, %v784
    %v898 = vadd.f32 %v896, %v897
    %s899 = sadd.s32 %s292, 4
    %v900 = vstv %s899
    %vm901 = vcmp.lt.s32.totalorder %v900, %v291
    %v902 = vsel %vm901, 1, 0
    %903 = vset.pattern.permute.xlu0 0
    %904 = vperm.xlu0 %903, %v902
    %v905 = vpop.permute.xlu0 %904
    %vm906 = vcmp.eq.s32.totalorder %v905, 1
    %v907 = vsel %vm906, %v898, %v784
    %s908 = smul.u32 5, 3
    %s909 = smul.addr %s908, 8
    %s910 = scalar_lea.vmem [#allocation2], %s909
    %v911 = vld [vmem:[%s910] sm:$0xff]
    %v912 = vld [vmem:[%s910 + $0x8] sm:$0xff]
    %v913 = vld [vmem:[%s910 + $0x10] sm:$0xff]
    %914 = vmatpush.msra.mxu0 %v284
    %915 = vmatpush.msra.mxu0 %v281
    %916 = vmatpush.msra.mxu0 %v278
    %917 = vmatpush.msra.mxu0 %v275
    %918 = vmatpush.msra.mxu0 %v272
    %919 = vmatpush.msra.mxu0 %v269
    %920 = vmatpush.msra.mxu0 %v266
    %921 = vmatpush.msra.mxu0 %v263
    %922 = vmatpush.msra.mxu0 %v260
    %923 = vmatpush.msra.mxu0 %v257
    %924 = vmatpush.msra.mxu0 %v254
    %925 = vmatpush.msra.mxu0 %v251
    %926 = vmatpush.msra.mxu0 %v248
    %927 = vmatpush.msra.mxu0 %v245
    %928 = vmatpush.msra.mxu0 %v242
    %929 = vmatpush.msra.mxu0 %v239
    %930 = vmatmul.f32.gmra.mxu0 %v907
    %v931 = vpop.f32.mrf.mxu0
    %v932 = vadd.f32 0.0, %v931
    %933 = vdwg.mxu0
    %934 = vmatpush.msra.mxu0 %v285
    %935 = vmatpush.msra.mxu0 %v282
    %936 = vmatpush.msra.mxu0 %v279
    %937 = vmatpush.msra.mxu0 %v276
    %938 = vmatpush.msra.mxu0 %v273
    %939 = vmatpush.msra.mxu0 %v270
    %940 = vmatpush.msra.mxu0 %v267
    %941 = vmatpush.msra.mxu0 %v264
    %942 = vmatpush.msra.mxu0 %v261
    %943 = vmatpush.msra.mxu0 %v258
    %944 = vmatpush.msra.mxu0 %v255
    %945 = vmatpush.msra.mxu0 %v252
    %946 = vmatpush.msra.mxu0 %v249
    %947 = vmatpush.msra.mxu0 %v246
    %948 = vmatpush.msra.mxu0 %v243
    %949 = vmatpush.msra.mxu0 %v240
    %950 = vmatmul.f32.gmra.mxu0 %v907
    %v951 = vpop.f32.mrf.mxu0
    %v952 = vadd.f32 0.0, %v951
    %953 = vdwg.mxu0
    %954 = vmatpush.msra.mxu0 %v286
    %955 = vmatpush.msra.mxu0 %v283
    %956 = vmatpush.msra.mxu0 %v280
    %957 = vmatpush.msra.mxu0 %v277
    %958 = vmatpush.msra.mxu0 %v274
    %959 = vmatpush.msra.mxu0 %v271
    %960 = vmatpush.msra.mxu0 %v268
    %961 = vmatpush.msra.mxu0 %v265
    %962 = vmatpush.msra.mxu0 %v262
    %963 = vmatpush.msra.mxu0 %v259
    %964 = vmatpush.msra.mxu0 %v256
    %965 = vmatpush.msra.mxu0 %v253
    %966 = vmatpush.msra.mxu0 %v250
    %967 = vmatpush.msra.mxu0 %v247
    %968 = vmatpush.msra.mxu0 %v244
    %969 = vmatpush.msra.mxu0 %v241
    %970 = vmatmul.f32.gmra.mxu0 %v907
    %v971 = vpop.f32.mrf.mxu0
    %v972 = vadd.f32 0.0, %v971
    %973 = vdwg.mxu0
    %v974 = vadd.f32 %v911, %v932
    %v975 = vxor.u32 %v974, 2147483648
    %v976 = vmul.f32 %v975, 1.442695
    %v977 = vpow.pop %v976
    %v978 = vadd.f32 %v977, 1.0
    %v979 = vrcp.pop %v978
    %v980 = vmul.f32 %v978, %v979
    %v981 = vsub.f32 1.0, %v980
    %v982 = vmul.f32 %v979, %v981
    %v983 = vadd.f32 %v979, %v982
    %vm984 = vweird.f32 %v978
    %vm985 = vweird.f32 %v979
    %vm986 = vmor %vm984, %vm985
    %v987 = vsel %vm986, %v979, %v983
    %v988 = vand.u32 2147483647, %v978
    %vm989 = vcmp.eq.f32.partialorder %v988, 8.507059e+37
    %v990 = vand.u32 %v978, 2147483648
    %v991 = vor.u32 1.1754944e-38, %v990
    %v992 = vsel %vm989, %v991, %v987
    %v993 = vmul.f32 1.0, %v992
    %v994 = vadd.f32 %v912, %v952
    %v995 = vxor.u32 %v994, 2147483648
    %v996 = vmul.f32 %v995, 1.442695
    %v997 = vpow.pop %v996
    %v998 = vadd.f32 %v997, 1.0
    %v999 = vrcp.pop %v998
    %v1000 = vmul.f32 %v998, %v999
    %v1001 = vsub.f32 1.0, %v1000
    %v1002 = vmul.f32 %v999, %v1001
    %v1003 = vadd.f32 %v999, %v1002
    %vm1004 = vweird.f32 %v998
    %vm1005 = vweird.f32 %v999
    %vm1006 = vmor %vm1004, %vm1005
    %v1007 = vsel %vm1006, %v999, %v1003
    %v1008 = vand.u32 2147483647, %v998
    %vm1009 = vcmp.eq.f32.partialorder %v1008, 8.507059e+37
    %v1010 = vand.u32 %v998, 2147483648
    %v1011 = vor.u32 1.1754944e-38, %v1010
    %v1012 = vsel %vm1009, %v1011, %v1007
    %v1013 = vmul.f32 1.0, %v1012
    %v1014 = vadd.f32 %v972, %v289
    %v1015 = vmul.f32 %v993, %v1014
    %v1016 = vadd.f32 %v913, %v1015
    %v1017 = vtanh.pop %v1016
    %v1018 = vsub.f32 1.0, %v1013
    %v1019 = vmul.f32 %v1018, %v1017
    %v1020 = vmul.f32 %v1013, %v907
    %v1021 = vadd.f32 %v1019, %v1020
    %s1022 = sadd.s32 %s292, 5
    %v1023 = vstv %s1022
    %vm1024 = vcmp.lt.s32.totalorder %v1023, %v291
    %v1025 = vsel %vm1024, 1, 0
    %1026 = vset.pattern.permute.xlu0 0
    %1027 = vperm.xlu0 %1026, %v1025
    %v1028 = vpop.permute.xlu0 %1027
    %vm1029 = vcmp.eq.s32.totalorder %v1028, 1
    %v1030 = vsel %vm1029, %v1021, %v907
    %s1031 = smul.u32 6, 3
    %s1032 = smul.addr %s1031, 8
    %s1033 = scalar_lea.vmem [#allocation2], %s1032
    %v1034 = vld [vmem:[%s1033] sm:$0xff]
    %v1035 = vld [vmem:[%s1033 + $0x8] sm:$0xff]
    %v1036 = vld [vmem:[%s1033 + $0x10] sm:$0xff]
    %1037 = vmatpush.msra.mxu0 %v284
    %1038 = vmatpush.msra.mxu0 %v281
    %1039 = vmatpush.msra.mxu0 %v278
    %1040 = vmatpush.msra.mxu0 %v275
    %1041 = vmatpush.msra.mxu0 %v272
    %1042 = vmatpush.msra.mxu0 %v269
    %1043 = vmatpush.msra.mxu0 %v266
    %1044 = vmatpush.msra.mxu0 %v263
    %1045 = vmatpush.msra.mxu0 %v260
    %1046 = vmatpush.msra.mxu0 %v257
    %1047 = vmatpush.msra.mxu0 %v254
    %1048 = vmatpush.msra.mxu0 %v251
    %1049 = vmatpush.msra.mxu0 %v248
    %1050 = vmatpush.msra.mxu0 %v245
    %1051 = vmatpush.msra.mxu0 %v242
    %1052 = vmatpush.msra.mxu0 %v239
    %1053 = vmatmul.f32.gmra.mxu0 %v1030
    %v1054 = vpop.f32.mrf.mxu0
    %v1055 = vadd.f32 0.0, %v1054
    %1056 = vdwg.mxu0
    %1057 = vmatpush.msra.mxu0 %v285
    %1058 = vmatpush.msra.mxu0 %v282
    %1059 = vmatpush.msra.mxu0 %v279
    %1060 = vmatpush.msra.mxu0 %v276
    %1061 = vmatpush.msra.mxu0 %v273
    %1062 = vmatpush.msra.mxu0 %v270
    %1063 = vmatpush.msra.mxu0 %v267
    %1064 = vmatpush.msra.mxu0 %v264
    %1065 = vmatpush.msra.mxu0 %v261
    %1066 = vmatpush.msra.mxu0 %v258
    %1067 = vmatpush.msra.mxu0 %v255
    %1068 = vmatpush.msra.mxu0 %v252
    %1069 = vmatpush.msra.mxu0 %v249
    %1070 = vmatpush.msra.mxu0 %v246
    %1071 = vmatpush.msra.mxu0 %v243
    %1072 = vmatpush.msra.mxu0 %v240
    %1073 = vmatmul.f32.gmra.mxu0 %v1030
    %v1074 = vpop.f32.mrf.mxu0
    %v1075 = vadd.f32 0.0, %v1074
    %1076 = vdwg.mxu0
    %1077 = vmatpush.msra.mxu0 %v286
    %1078 = vmatpush.msra.mxu0 %v283
    %1079 = vmatpush.msra.mxu0 %v280
    %1080 = vmatpush.msra.mxu0 %v277
    %1081 = vmatpush.msra.mxu0 %v274
    %1082 = vmatpush.msra.mxu0 %v271
    %1083 = vmatpush.msra.mxu0 %v268
    %1084 = vmatpush.msra.mxu0 %v265
    %1085 = vmatpush.msra.mxu0 %v262
    %1086 = vmatpush.msra.mxu0 %v259
    %1087 = vmatpush.msra.mxu0 %v256
    %1088 = vmatpush.msra.mxu0 %v253
    %1089 = vmatpush.msra.mxu0 %v250
    %1090 = vmatpush.msra.mxu0 %v247
    %1091 = vmatpush.msra.mxu0 %v244
    %1092 = vmatpush.msra.mxu0 %v241
    %1093 = vmatmul.f32.gmra.mxu0 %v1030
    %v1094 = vpop.f32.mrf.mxu0
    %v1095 = vadd.f32 0.0, %v1094
    %1096 = vdwg.mxu0
    %v1097 = vadd.f32 %v1034, %v1055
    %v1098 = vxor.u32 %v1097, 2147483648
    %v1099 = vmul.f32 %v1098, 1.442695
    %v1100 = vpow.pop %v1099
    %v1101 = vadd.f32 %v1100, 1.0
    %v1102 = vrcp.pop %v1101
    %v1103 = vmul.f32 %v1101, %v1102
    %v1104 = vsub.f32 1.0, %v1103
    %v1105 = vmul.f32 %v1102, %v1104
    %v1106 = vadd.f32 %v1102, %v1105
    %vm1107 = vweird.f32 %v1101
    %vm1108 = vweird.f32 %v1102
    %vm1109 = vmor %vm1107, %vm1108
    %v1110 = vsel %vm1109, %v1102, %v1106
    %v1111 = vand.u32 2147483647, %v1101
    %vm1112 = vcmp.eq.f32.partialorder %v1111, 8.507059e+37
    %v1113 = vand.u32 %v1101, 2147483648
    %v1114 = vor.u32 1.1754944e-38, %v1113
    %v1115 = vsel %vm1112, %v1114, %v1110
    %v1116 = vmul.f32 1.0, %v1115
    %v1117 = vadd.f32 %v1035, %v1075
    %v1118 = vxor.u32 %v1117, 2147483648
    %v1119 = vmul.f32 %v1118, 1.442695
    %v1120 = vpow.pop %v1119
    %v1121 = vadd.f32 %v1120, 1.0
    %v1122 = vrcp.pop %v1121
    %v1123 = vmul.f32 %v1121, %v1122
    %v1124 = vsub.f32 1.0, %v1123
    %v1125 = vmul.f32 %v1122, %v1124
    %v1126 = vadd.f32 %v1122, %v1125
    %vm1127 = vweird.f32 %v1121
    %vm1128 = vweird.f32 %v1122
    %vm1129 = vmor %vm1127, %vm1128
    %v1130 = vsel %vm1129, %v1122, %v1126
    %v1131 = vand.u32 2147483647, %v1121
    %vm1132 = vcmp.eq.f32.partialorder %v1131, 8.507059e+37
    %v1133 = vand.u32 %v1121, 2147483648
    %v1134 = vor.u32 1.1754944e-38, %v1133
    %v1135 = vsel %vm1132, %v1134, %v1130
    %v1136 = vmul.f32 1.0, %v1135
    %v1137 = vadd.f32 %v1095, %v289
    %v1138 = vmul.f32 %v1116, %v1137
    %v1139 = vadd.f32 %v1036, %v1138
    %v1140 = vtanh.pop %v1139
    %v1141 = vsub.f32 1.0, %v1136
    %v1142 = vmul.f32 %v1141, %v1140
    %v1143 = vmul.f32 %v1136, %v1030
    %v1144 = vadd.f32 %v1142, %v1143
    %s1145 = sadd.s32 %s292, 6
    %v1146 = vstv %s1145
    %vm1147 = vcmp.lt.s32.totalorder %v1146, %v291
    %v1148 = vsel %vm1147, 1, 0
    %1149 = vset.pattern.permute.xlu0 0
    %1150 = vperm.xlu0 %1149, %v1148
    %v1151 = vpop.permute.xlu0 %1150
    %vm1152 = vcmp.eq.s32.totalorder %v1151, 1
    %v1153 = vsel %vm1152, %v1144, %v1030
    %s1154 = smul.u32 7, 3
    %s1155 = smul.addr %s1154, 8
    %s1156 = scalar_lea.vmem [#allocation2], %s1155
    %v1157 = vld [vmem:[%s1156] sm:$0xff]
    %v1158 = vld [vmem:[%s1156 + $0x8] sm:$0xff]
    %v1159 = vld [vmem:[%s1156 + $0x10] sm:$0xff]
    %1160 = vmatpush.msra.mxu0 %v284
    %1161 = vmatpush.msra.mxu0 %v281
    %1162 = vmatpush.msra.mxu0 %v278
    %1163 = vmatpush.msra.mxu0 %v275
    %1164 = vmatpush.msra.mxu0 %v272
    %1165 = vmatpush.msra.mxu0 %v269
    %1166 = vmatpush.msra.mxu0 %v266
    %1167 = vmatpush.msra.mxu0 %v263
    %1168 = vmatpush.msra.mxu0 %v260
    %1169 = vmatpush.msra.mxu0 %v257
    %1170 = vmatpush.msra.mxu0 %v254
    %1171 = vmatpush.msra.mxu0 %v251
    %1172 = vmatpush.msra.mxu0 %v248
    %1173 = vmatpush.msra.mxu0 %v245
    %1174 = vmatpush.msra.mxu0 %v242
    %1175 = vmatpush.msra.mxu0 %v239
    %1176 = vmatmul.f32.gmra.mxu0 %v1153
    %v1177 = vpop.f32.mrf.mxu0
    %v1178 = vadd.f32 0.0, %v1177
    %1179 = vdwg.mxu0
    %1180 = vmatpush.msra.mxu0 %v285
    %1181 = vmatpush.msra.mxu0 %v282
    %1182 = vmatpush.msra.mxu0 %v279
    %1183 = vmatpush.msra.mxu0 %v276
    %1184 = vmatpush.msra.mxu0 %v273
    %1185 = vmatpush.msra.mxu0 %v270
    %1186 = vmatpush.msra.mxu0 %v267
    %1187 = vmatpush.msra.mxu0 %v264
    %1188 = vmatpush.msra.mxu0 %v261
    %1189 = vmatpush.msra.mxu0 %v258
    %1190 = vmatpush.msra.mxu0 %v255
    %1191 = vmatpush.msra.mxu0 %v252
    %1192 = vmatpush.msra.mxu0 %v249
    %1193 = vmatpush.msra.mxu0 %v246
    %1194 = vmatpush.msra.mxu0 %v243
    %1195 = vmatpush.msra.mxu0 %v240
    %1196 = vmatmul.f32.gmra.mxu0 %v1153
    %v1197 = vpop.f32.mrf.mxu0
    %v1198 = vadd.f32 0.0, %v1197
    %1199 = vdwg.mxu0
    %1200 = vmatpush.msra.mxu0 %v286
    %1201 = vmatpush.msra.mxu0 %v283
    %1202 = vmatpush.msra.mxu0 %v280
    %1203 = vmatpush.msra.mxu0 %v277
    %1204 = vmatpush.msra.mxu0 %v274
    %1205 = vmatpush.msra.mxu0 %v271
    %1206 = vmatpush.msra.mxu0 %v268
    %1207 = vmatpush.msra.mxu0 %v265
    %1208 = vmatpush.msra.mxu0 %v262
    %1209 = vmatpush.msra.mxu0 %v259
    %1210 = vmatpush.msra.mxu0 %v256
    %1211 = vmatpush.msra.mxu0 %v253
    %1212 = vmatpush.msra.mxu0 %v250
    %1213 = vmatpush.msra.mxu0 %v247
    %1214 = vmatpush.msra.mxu0 %v244
    %1215 = vmatpush.msra.mxu0 %v241
    %1216 = vmatmul.f32.gmra.mxu0 %v1153
    %v1217 = vpop.f32.mrf.mxu0
    %v1218 = vadd.f32 0.0, %v1217
    %1219 = vdwg.mxu0
    %v1220 = vadd.f32 %v1157, %v1178
    %v1221 = vxor.u32 %v1220, 2147483648
    %v1222 = vmul.f32 %v1221, 1.442695
    %v1223 = vpow.pop %v1222
    %v1224 = vadd.f32 %v1223, 1.0
    %v1225 = vrcp.pop %v1224
    %v1226 = vmul.f32 %v1224, %v1225
    %v1227 = vsub.f32 1.0, %v1226
    %v1228 = vmul.f32 %v1225, %v1227
    %v1229 = vadd.f32 %v1225, %v1228
    %vm1230 = vweird.f32 %v1224
    %vm1231 = vweird.f32 %v1225
    %vm1232 = vmor %vm1230, %vm1231
    %v1233 = vsel %vm1232, %v1225, %v1229
    %v1234 = vand.u32 2147483647, %v1224
    %vm1235 = vcmp.eq.f32.partialorder %v1234, 8.507059e+37
    %v1236 = vand.u32 %v1224, 2147483648
    %v1237 = vor.u32 1.1754944e-38, %v1236
    %v1238 = vsel %vm1235, %v1237, %v1233
    %v1239 = vmul.f32 1.0, %v1238
    %v1240 = vadd.f32 %v1158, %v1198
    %v1241 = vxor.u32 %v1240, 2147483648
    %v1242 = vmul.f32 %v1241, 1.442695
    %v1243 = vpow.pop %v1242
    %v1244 = vadd.f32 %v1243, 1.0
    %v1245 = vrcp.pop %v1244
    %v1246 = vmul.f32 %v1244, %v1245
    %v1247 = vsub.f32 1.0, %v1246
    %v1248 = vmul.f32 %v1245, %v1247
    %v1249 = vadd.f32 %v1245, %v1248
    %vm1250 = vweird.f32 %v1244
    %vm1251 = vweird.f32 %v1245
    %vm1252 = vmor %vm1250, %vm1251
    %v1253 = vsel %vm1252, %v1245, %v1249
    %v1254 = vand.u32 2147483647, %v1244
    %vm1255 = vcmp.eq.f32.partialorder %v1254, 8.507059e+37
    %v1256 = vand.u32 %v1244, 2147483648
    %v1257 = vor.u32 1.1754944e-38, %v1256
    %v1258 = vsel %vm1255, %v1257, %v1253
    %v1259 = vmul.f32 1.0, %v1258
    %v1260 = vadd.f32 %v1218, %v289
    %v1261 = vmul.f32 %v1239, %v1260
    %v1262 = vadd.f32 %v1159, %v1261
    %v1263 = vtanh.pop %v1262
    %v1264 = vsub.f32 1.0, %v1259
    %v1265 = vmul.f32 %v1264, %v1263
    %v1266 = vmul.f32 %v1259, %v1153
    %v1267 = vadd.f32 %v1265, %v1266
    %s1268 = sadd.s32 %s292, 7
    %v1269 = vstv %s1268
    %vm1270 = vcmp.lt.s32.totalorder %v1269, %v291
    %v1271 = vsel %vm1270, 1, 0
    %1272 = vset.pattern.permute.xlu0 0
    %1273 = vperm.xlu0 %1272, %v1271
    %v1274 = vpop.permute.xlu0 %1273
    %vm1275 = vcmp.eq.s32.totalorder %v1274, 1
    %v1276 = vsel %vm1275, %v1267, %v1153
    %1277 = vst [vmem:[#allocation6] sm:$0xff] %v1276
    // Predicated region
    $region34: #{tpu_custom_call.1} parent=1 // pred_check
      _
    $region35: #{tpu_custom_call.1} parent=1 // pred_check_branch
      %1279 = sbr.rel (0) target = $region37
    $region36: #{tpu_custom_call.1} parent=1 // pred_region
      %1281 = vsyncadd [#allocation5], 0
      %s1283 = sshll.u32 [#allocation6], 4
      %s1284 = int_to_ptr.vmem [resolvable:$true] %s1283
      %s1285 = sshll.u32 %s6, 4
      %s1286 = int_to_ptr.hbm [resolvable:$true] %s1285
      %1288 = dma.vmem_to_hbm [thread:$0]  %s1284, 128, %s1286, [#allocation5]
    $region37: #{tpu_custom_call.1} parent=1 // pred_fallthru
      _
    // Predicated region
    $region38: #{tpu_custom_call.1} parent=1 // pred_check
      _
    $region39: #{tpu_custom_call.1} parent=1 // pred_check_branch
      %1290 = sbr.rel (0) target = $region41
    $region40: #{tpu_custom_call.1} parent=1 // pred_region
      %1292 = dma.done [#allocation5], 128
    $region41: #{tpu_custom_call.1} parent=1 // pred_fallthru
      _
    %1293 = vsyncpa [#allocation4], 1
    %1294 = vsyncpa [#allocation5], 1

</llo_original>
